<compile_context>
chip_gen: v7x
topology: tpu7x:2x2x1
jax: 0.10.0
libtpu: 0.0.40
codegen_flags: <defaults>
</compile_context>

<pallas_src>
import functools

import jax
import jax.numpy as jnp
from jax import lax
from jax.experimental import pallas as pl
from jax.experimental.pallas import tpu as pltpu


# ----------------------------------------------------------------------------
# Small helpers
# ----------------------------------------------------------------------------
def _round_up(x, m):
    return (x + m - 1) // m * m


def _tpu_generation():
    try:
        kind = jax.devices()[0].device_kind.lower()
    except Exception:
        return 0
    for g in (7, 6, 5, 4, 3, 2):
        if f"v{g}" in kind:
            return g
    return 0


def _default_gate_dtype(gen=None):
    gen = _tpu_generation() if gen is None else gen
    # v6e/v7x have bf16 VPU + EUP (2x elementwise/transcendental throughput);
    # v5e and older do not -> keep the gate math in f32 there.
    return jnp.bfloat16 if gen >= 6 else jnp.float32


def _vmem_limit_bytes(gen):
    if gen >= 7:
        return 48 * 1024 * 1024       # v7x: 64 MiB physical per TensorCore
    if gen in (5, 6):
        return 100 * 1024 * 1024      # v5e/v6e: 128 MiB physical
    return 32 * 1024 * 1024           # conservative fallback


def _sigmoid_one_eup(x):
    # sigmoid(x) == 0.5*tanh(0.5*x) + 0.5 : one EUP push instead of exp+divide.
    return 0.5 * jnp.tanh(0.5 * x) + 0.5


def _pad_gate_cols(w, h, hp):
    """[R, 4h] -> [R, 4hp], zero padding each gate's column block to width hp."""
    rows = w.shape[0]
    out = jnp.zeros((rows, 4 * hp), w.dtype)
    for g in range(4):
        out = out.at[:, g * hp:g * hp + h].set(w[:, g * h:(g + 1) * h])
    return out


def _largest_divisor_leq(n, cap):
    cap = max(1, min(cap, n))
    for d in range(cap, 0, -1):
        if n % d == 0:
            return d
    return 1


# ----------------------------------------------------------------------------
# Fused kernel: per-chunk input projection + serial LSTM recurrence
# ----------------------------------------------------------------------------
def _lstm_fused_kernel(x_ref, wx_ref, wh_ref, b_ref, out_ref,
                       zx_scr, h_scr, c_scr, *, gate_dtype, unroll):
    t_chunk, b_blk, e_dim = x_ref.shape
    hp = h_scr.shape[-1]

    @pl.when(pl.program_id(1) == 0)
    def _():
        # init_hidden_and_memory: zeros (per batch block / per core)
        h_scr[...] = jnp.zeros_like(h_scr)
        c_scr[...] = jnp.zeros_like(c_scr)

    # Chunk-entry input projection: one big-M matmul (M = t_chunk*b_blk rows on
    # the MXU), bias folded in once per chunk. bf16 operands, f32 accumulation.
    xm = x_ref[...].reshape(t_chunk * b_blk, e_dim)
    zx = jnp.dot(xm, wx_ref[...], preferred_element_type=jnp.float32) + b_ref[...]
    zx_scr[...] = zx.reshape(t_chunk, b_blk, 4 * hp)

    wh = wh_ref[...]                               # [Hp, 4Hp] bf16, resident

    def step(t, carry):
        h_bf, c = carry                            # h: bf16 [b,Hp], c: f32 [b,Hp]
        # Single MXU push per step: h @ Wh (bf16 operands, f32 accumulation)
        # plus the precomputed x-projection for this timestep.
        z = jnp.dot(h_bf, wh, preferred_element_type=jnp.float32) + zx_scr[t]
        zg = z.astype(gate_dtype)                  # bf16 gates on v6e/v7x, f32 on v5e
        f_t = _sigmoid_one_eup(zg[:, 0 * hp:1 * hp])
        i_t = _sigmoid_one_eup(zg[:, 1 * hp:2 * hp])
        g_t = jnp.tanh(zg[:, 2 * hp:3 * hp])
        o_t = _sigmoid_one_eup(zg[:, 3 * hp:4 * hp])

        c_new = f_t.astype(jnp.float32) * c + (i_t * g_t).astype(jnp.float32)
        h_new = o_t.astype(jnp.float32) * jnp.tanh(c_new)

        out_ref[t] = h_new                         # lane-dense [b_blk, Hp] f32 store
        return h_new.astype(jnp.bfloat16), c_new   # carry h in bf16 (one cast/step)

    h_bf, c = lax.fori_loop(0, t_chunk, step, (h_scr[...], c_scr[...]),
                            unroll=unroll)
    h_scr[...] = h_bf
    c_scr[...] = c


def lstm_pallas(embeddings, wh, wx, b, *, gate_dtype=None, t_chunk=None,
                n_b_blocks=None):
    """embeddings: [S, B, E] f32; wh [H,4H], wx [E,4H], b [1,4H] (gate order f,i,g,o).
    Returns hidden_states [S, B, H] f32 (module forward semantics)."""
    S, B, E = embeddings.shape
    H = wh.shape[0]
    assert wh.shape == (H, 4 * H) and wx.shape == (E, 4 * H) and b.shape == (1, 4 * H)

    gen = _tpu_generation()
    if gate_dtype is None:
        gate_dtype = _default_gate_dtype(gen)

    # Lane/sublane alignment: H -> multiple of 128, B -> multiple of 8.
    # Padded weight/bias columns are zero, so padded h/c lanes are exactly 0 and
    # never perturb the real lanes.
    Hp = _round_up(H, 128)
    Bp = _round_up(B, 8)

    wh_rows = jnp.zeros((Hp, 4 * H), wh.dtype).at[:H, :].set(wh)
    wh_p = _pad_gate_cols(wh_rows, H, Hp).astype(jnp.bfloat16)        # [Hp, 4Hp]
    wx_p = _pad_gate_cols(wx, H, Hp).astype(jnp.bfloat16)             # [E, 4Hp]
    b_p = _pad_gate_cols(b.astype(jnp.float32), H, Hp)                # [1, 4Hp]

    x = embeddings
    if Bp != B:
        x = jnp.pad(x, ((0, 0), (0, Bp - B), (0, 0)))
    x = x.astype(jnp.bfloat16)                                        # [S, Bp, E]

    # NOTE: the recurrence is row-starved on the MXU unless B is large; stack
    # independent sequences into B where possible (>=128 v5e, >=256 v6e/v7x).
    if n_b_blocks is None:
        # Shard batch across v7x's two TensorCores when each block stays >= 8.
        n_b_blocks = 2 if (gen >= 7 and Bp >= 16 and Bp % 16 == 0) else 1
    assert Bp % n_b_blocks == 0
    b_blk = Bp // n_b_blocks

    # Resident weights: single-buffer them once they are big (v7x 64 MiB VMEM).
    weight_bytes = (Hp + E) * 4 * Hp * 2                              # wh + wx bf16
    single_buffer_weights = weight_bytes > 4 * 1024 * 1024
    weight_kwargs = (dict(pipeline_mode=pl.Buffered(1))
                     if single_buffer_weights else {})

    vmem_limit = _vmem_limit_bytes(gen)
    if t_chunk is None:
        fixed = (weight_bytes * (1 if single_buffer_weights else 2)
                 + 2 * 4 * Hp * 4                    # bias (double-buffered)
                 + b_blk * Hp * (2 + 4))             # h (bf16) / c (f32) carry
        per_t = b_blk * (2 * E * 2                   # x chunk bf16, double-buffered
                         + 2 * Hp * 4                # out chunk f32, double-buffered
                         + 4 * Hp * 4)               # zx scratch f32
        budget = int(vmem_limit * 0.85) - fixed
        t_max = max(1, min(budget // per_t, 128)) if budget > per_t else 1
        t_chunk = _largest_divisor_leq(S, t_max)
    assert S % t_chunk == 0, "seq_len must be divisible by t_chunk"

    grid = (n_b_blocks, S // t_chunk)
    kernel = functools.partial(_lstm_fused_kernel, gate_dtype=gate_dtype,
                               unroll=min(8, t_chunk))

    out = pl.pallas_call(
        kernel,
        out_shape=jax.ShapeDtypeStruct((S, Bp, Hp), jnp.float32),
        grid_spec=pltpu.PrefetchScalarGridSpec(
            num_scalar_prefetch=0,
            grid=grid,
            in_specs=[
                # Per (batch-block, time-chunk) slab of embeddings: one DMA/chunk.
                pl.BlockSpec((t_chunk, b_blk, E), lambda bi, tc: (tc, bi, 0)),
                # Resident weights / bias (constant block index across the grid).
                pl.BlockSpec((E, 4 * Hp), lambda bi, tc: (0, 0), **weight_kwargs),
                pl.BlockSpec((Hp, 4 * Hp), lambda bi, tc: (0, 0), **weight_kwargs),
                pl.BlockSpec((1, 4 * Hp), lambda bi, tc: (0, 0)),
            ],
            # Chunked, lane-dense output: one HBM writeback per chunk.
            out_specs=pl.BlockSpec((t_chunk, b_blk, Hp), lambda bi, tc: (tc, bi, 0)),
            scratch_shapes=[
                pltpu.VMEM((t_chunk, b_blk, 4 * Hp), jnp.float32),   # zx chunk
                pltpu.VMEM((b_blk, Hp), jnp.bfloat16),               # h_t carry
                pltpu.VMEM((b_blk, Hp), jnp.float32),                # c_t carry
            ],
        ),
        compiler_params=pltpu.CompilerParams(
            # batch blocks independent (megacore on v7x); time is a recurrence.
            dimension_semantics=("parallel", "arbitrary"),
            vmem_limit_bytes=vmem_limit,
        ),
    )(x, wx_p, wh_p, b_p)

    return out[:, :B, :H]


# ----------------------------------------------------------------------------
# Pure-JAX references
# ----------------------------------------------------------------------------
def lstm_reference_f32(embeddings, wh, wx, b):
    """Module semantics in full f32 (lax.scan over time)."""
    H = wh.shape[0]

    def step(carry, x):
        h, c = carry
        z = h @ wh + x @ wx + b
        f = jax.nn.sigmoid(z[:, 0 * H:1 * H])
        i = jax.nn.sigmoid(z[:, 1 * H:2 * H])
        g = jnp.tanh(z[:, 2 * H:3 * H])
        o = jax.nn.sigmoid(z[:, 3 * H:4 * H])
        c_new = f * c + i * g
        h_new = o * jnp.tanh(c_new)
        return (h_new, c_new), h_new

    S, B, E = embeddings.shape
    init = (jnp.zeros((B, H), jnp.float32), jnp.zeros((B, H), jnp.float32))
    _, hs = lax.scan(step, init, embeddings)
    return hs


def lstm_reference_matched(embeddings, wh, wx, b, gate_dtype):
    """Same numerics as the kernel: bf16 MXU operands, f32 accumulation, bf16 h
    carry, tanh-based sigmoid, gate math in `gate_dtype`."""
    S, B, E = embeddings.shape
    H = wh.shape[0]
    wh_b = wh.astype(jnp.bfloat16)
    wx_b = wx.astype(jnp.bfloat16)
    zx = (jnp.dot(embeddings.astype(jnp.bfloat16).reshape(S * B, E), wx_b,
                  preferred_element_type=jnp.float32) + b).reshape(S, B, 4 * H)

    def step(carry, zx_t):
        h_bf, c = carry
        z = jnp.dot(h_bf, wh_b, preferred_element_type=jnp.float32) + zx_t
        zg = z.astype(gate_dtype)
        f = _sigmoid_one_eup(zg[:, 0 * H:1 * H])
        i = _sigmoid_one_eup(zg[:, 1 * H:2 * H])
        g = jnp.tanh(zg[:, 2 * H:3 * H])
        o = _sigmoid_one_eup(zg[:, 3 * H:4 * H])
        c_new = f.astype(jnp.float32) * c + (i * g).astype(jnp.float32)
        h_new = o.astype(jnp.float32) * jnp.tanh(c_new)
        return (h_new.astype(jnp.bfloat16), c_new), h_new

    init = (jnp.zeros((B, H), jnp.bfloat16), jnp.zeros((B, H), jnp.float32))
    _, hs = lax.scan(step, init, zx)
    return hs


if __name__ == "__main__":
    # Small, deterministic setup consistent with the module's forward().
    batch_size = 8
    seq_len = 8
    hidden_dim = 32
    embedding_dim = 16
    vocab_size = 50
    padding_index = 0

    key = jax.random.PRNGKey(0)
    k_emb, k_w, k_b, k_seq = jax.random.split(key, 4)

    # Embedding table (padding_idx row zeroed, like nn.Embedding(padding_idx=...)).
    emb_table = jax.random.normal(k_emb, (vocab_size, embedding_dim), jnp.float32)
    emb_table = emb_table.at[padding_index].set(0.0)

    # Linear params for the 4 gates, PyTorch-style uniform(-1/sqrt(in), 1/sqrt(in)).
    in_dim = hidden_dim + embedding_dim
    bound = 1.0 / jnp.sqrt(jnp.float32(in_dim))
    W_all = jax.random.uniform(k_w, (4, hidden_dim, in_dim), jnp.float32, -bound, bound)
    b_all = jax.random.uniform(k_b, (4, hidden_dim), jnp.float32, -bound, bound)

    # Split into hidden / input halves (cat order is (prev_hidden, cur_input)) and
    # transpose so the kernel right-multiplies: Wh [H, 4H], Wx [E, 4H].
    Wh_gates = W_all[:, :, :hidden_dim]                               # [4, H, H]
    Wx_gates = W_all[:, :, hidden_dim:]                               # [4, H, E]
    wh = jnp.concatenate([Wh_gates[g].T for g in range(4)], axis=1)   # [H, 4H]
    wx = jnp.concatenate([Wx_gates[g].T for g in range(4)], axis=1)   # [E, 4H]
    b = b_all.reshape(1, 4 * hidden_dim)                              # [1, 4H]

    # Token sequences [batch, seq_len], including some padding tokens.
    sequences = jax.random.randint(k_seq, (batch_size, seq_len), 0, vocab_size)

    # Glue (matches module.forward): embed, transpose to time-major.
    # TODO(synk): dropout omitted (dropout=None path / eval semantics); embedding
    # gather stays in plain JAX (data-dependent gather, no clean blocked pattern).
    embeddings = emb_table[sequences]                  # [B, S, E]
    embeddings = jnp.transpose(embeddings, (1, 0, 2))  # [S, B, E]

    gate_dtype = _default_gate_dtype()

    out = lstm_pallas(embeddings, wh, wx, b, gate_dtype=gate_dtype)
    out = jax.block_until_ready(out)
    assert out.shape == (seq_len, batch_size, hidden_dim)

    # Strict check: kernel math vs numerics-matched reference.
    ref_m = lstm_reference_matched(embeddings, wh, wx, b, gate_dtype)
    tol = 1e-4 if gate_dtype == jnp.float32 else 1e-2
    assert jnp.allclose(out, ref_m, atol=tol, rtol=tol), \
        "mismatch vs numerics-matched reference"

    # Semantics check: loose tolerance vs the full-f32 module reference.
    ref_f32 = lstm_reference_f32(embeddings, wh, wx, b)
    assert jnp.allclose(out, ref_f32, atol=5e-2, rtol=5e-2), \
        "mismatch vs f32 reference"

    print("KERNEL_OK")
</pallas_src>

<mosaic_0001>
module attributes {stable_mosaic.version = 11 : i64} {
  func.func @_lstm_fused_kernel(%arg0: i32, %arg1: i32, %arg2: memref<8x8x16xbf16, #tpu.memory_space<vmem>>, %arg3: memref<16x512xbf16, #tpu.memory_space<vmem>>, %arg4: memref<128x512xbf16, #tpu.memory_space<vmem>>, %arg5: memref<1x512xf32, #tpu.memory_space<vmem>>, %arg6: memref<8x8x128xf32, #tpu.memory_space<vmem>>, %arg7: memref<8x8x512xf32, #tpu.memory_space<vmem>>, %arg8: memref<8x128xbf16, #tpu.memory_space<vmem>>, %arg9: memref<8x128xf32, #tpu.memory_space<vmem>>) attributes {dimension_semantics = [#tpu.dimension_semantics<parallel>, #tpu.dimension_semantics<arbitrary>], iteration_bounds = array<i64: 1, 1>, scalar_prefetch = 0 : i64, scratch_operands = 3 : i64, tpu.core_type = #tpu.core_type<tc>, window_params = [{transform_indices = @transform_0, window_bounds = array<i64: 8, 8, 16>}, {pipeline_mode = #tpu.pipeline_mode<synchronous>, transform_indices = @transform_1, window_bounds = array<i64: 16, 512>}, {pipeline_mode = #tpu.pipeline_mode<synchronous>, transform_indices = @transform_2, window_bounds = array<i64: 128, 512>}, {pipeline_mode = #tpu.pipeline_mode<synchronous>, transform_indices = @transform_3, window_bounds = array<i64: 1, 512>}, {transform_indices = @transform_4, window_bounds = array<i64: 8, 8, 128>}]} {
    %c0_i32 = arith.constant 0 : i32
    %0 = arith.cmpi eq, %arg1, %c0_i32 : i32
    %1 = arith.extui %0 : i1 to i32
    %c0_i32_0 = arith.constant 0 : i32
    %2 = arith.cmpi ne, %1, %c0_i32_0 : i32
    scf.if %2 {
      %cst_133 = arith.constant 0.000000e+00 : bf16
      %345 = vector.broadcast %cst_133 : bf16 to vector<8x128xbf16>
      %c0_134 = arith.constant 0 : index
      %c0_135 = arith.constant 0 : index
      %346 = vector.load %arg8[%c0_134, %c0_135] : memref<8x128xbf16, #tpu.memory_space<vmem>>, vector<8x128xbf16>
      tpu.vector_store %arg8[%c0_134, %c0_135], %345 {strides = array<i32>} : memref<8x128xbf16, #tpu.memory_space<vmem>>, vector<8x128xbf16>,
      %cst_136 = arith.constant 0.000000e+00 : f32
      %347 = vector.broadcast %cst_136 : f32 to vector<8x128xf32>
      %c0_137 = arith.constant 0 : index
      %c0_138 = arith.constant 0 : index
      %348 = vector.load %arg9[%c0_137, %c0_138] : memref<8x128xf32, #tpu.memory_space<vmem>>, vector<8x128xf32>
      tpu.vector_store %arg9[%c0_137, %c0_138], %347 {strides = array<i32>} : memref<8x128xf32, #tpu.memory_space<vmem>>, vector<8x128xf32>,
    } else {
    }
    %c0 = arith.constant 0 : index
    %c0_1 = arith.constant 0 : index
    %c0_2 = arith.constant 0 : index
    %3 = vector.load %arg2[%c0, %c0_1, %c0_2] : memref<8x8x16xbf16, #tpu.memory_space<vmem>>, vector<8x8x16xbf16>
    %4 = vector.shape_cast %3 : vector<8x8x16xbf16> to vector<64x16xbf16>
    %c0_3 = arith.constant 0 : index
    %c0_4 = arith.constant 0 : index
    %5 = vector.load %arg3[%c0_3, %c0_4] : memref<16x512xbf16, #tpu.memory_space<vmem>>, vector<16x512xbf16>
    %cst = arith.constant dense<0.000000e+00> : vector<64x512xf32>
    %6 = tpu.matmul %4, %5, %cst {dimension_numbers = #tpu.dot_dimension_numbers<[1], [0], [0], [1], [0, 0, 1, 1], [], []>} : vector<64x16xbf16>, vector<16x512xbf16>, vector<64x512xf32> -> vector<64x512xf32>
    %c0_5 = arith.constant 0 : index
    %c0_6 = arith.constant 0 : index
    %7 = vector.load %arg5[%c0_5, %c0_6] : memref<1x512xf32, #tpu.memory_space<vmem>>, vector<1x512xf32>
    %8 = vector.broadcast %7 : vector<1x512xf32> to vector<64x512xf32>
    %9 = arith.addf %6, %8 : vector<64x512xf32>
    %10 = vector.shape_cast %9 : vector<64x512xf32> to vector<8x8x512xf32>
    %c0_7 = arith.constant 0 : index
    %c0_8 = arith.constant 0 : index
    %c0_9 = arith.constant 0 : index
    %11 = vector.load %arg7[%c0_7, %c0_8, %c0_9] : memref<8x8x512xf32, #tpu.memory_space<vmem>>, vector<8x8x512xf32>
    tpu.vector_store %arg7[%c0_7, %c0_8, %c0_9], %10 {strides = array<i32>} : memref<8x8x512xf32, #tpu.memory_space<vmem>>, vector<8x8x512xf32>,
    %c0_10 = arith.constant 0 : index
    %c0_11 = arith.constant 0 : index
    %12 = vector.load %arg4[%c0_10, %c0_11] : memref<128x512xbf16, #tpu.memory_space<vmem>>, vector<128x512xbf16>
    %c0_12 = arith.constant 0 : index
    %c0_13 = arith.constant 0 : index
    %13 = vector.load %arg8[%c0_12, %c0_13] : memref<8x128xbf16, #tpu.memory_space<vmem>>, vector<8x128xbf16>
    %c0_14 = arith.constant 0 : index
    %c0_15 = arith.constant 0 : index
    %14 = vector.load %arg9[%c0_14, %c0_15] : memref<8x128xf32, #tpu.memory_space<vmem>>, vector<8x128xf32>
    %c0_i32_16 = arith.constant 0 : i32
    %cst_17 = arith.constant dense<0.000000e+00> : vector<8x512xf32>
    %15 = tpu.matmul %13, %12, %cst_17 {dimension_numbers = #tpu.dot_dimension_numbers<[1], [0], [0], [1], [0, 0, 1, 1], [], []>} : vector<8x128xbf16>, vector<128x512xbf16>, vector<8x512xf32> -> vector<8x512xf32>
    %16 = arith.index_cast %c0_i32_16 : i32 to index
    %c0_18 = arith.constant 0 : index
    %c0_19 = arith.constant 0 : index
    %17 = vector.load %arg7[%16, %c0_18, %c0_19] : memref<8x8x512xf32, #tpu.memory_space<vmem>>, vector<1x8x512xf32>
    %18 = vector.shape_cast %17 : vector<1x8x512xf32> to vector<8x512xf32>
    %19 = arith.addf %15, %18 : vector<8x512xf32>
    %20 = vector.extract_strided_slice %19 {offsets = [0, 0], sizes = [8, 128], strides = [1, 1]} : vector<8x512xf32> to vector<8x128xf32>
    %cst_20 = arith.constant 5.000000e-01 : f32
    %21 = vector.broadcast %cst_20 : f32 to vector<8x128xf32>
    %22 = arith.mulf %21, %20 : vector<8x128xf32>
    %23 = math.tanh %22 : vector<8x128xf32>
    %cst_21 = arith.constant 5.000000e-01 : f32
    %24 = vector.broadcast %cst_21 : f32 to vector<8x128xf32>
    %25 = arith.mulf %24, %23 : vector<8x128xf32>
    %cst_22 = arith.constant 5.000000e-01 : f32
    %26 = vector.broadcast %cst_22 : f32 to vector<8x128xf32>
    %27 = arith.addf %25, %26 : vector<8x128xf32>
    %28 = vector.extract_strided_slice %19 {offsets = [0, 128], sizes = [8, 128], strides = [1, 1]} : vector<8x512xf32> to vector<8x128xf32>
    %cst_23 = arith.constant 5.000000e-01 : f32
    %29 = vector.broadcast %cst_23 : f32 to vector<8x128xf32>
    %30 = arith.mulf %29, %28 : vector<8x128xf32>
    %31 = math.tanh %30 : vector<8x128xf32>
    %cst_24 = arith.constant 5.000000e-01 : f32
    %32 = vector.broadcast %cst_24 : f32 to vector<8x128xf32>
    %33 = arith.mulf %32, %31 : vector<8x128xf32>
    %cst_25 = arith.constant 5.000000e-01 : f32
    %34 = vector.broadcast %cst_25 : f32 to vector<8x128xf32>
    %35 = arith.addf %33, %34 : vector<8x128xf32>
    %36 = vector.extract_strided_slice %19 {offsets = [0, 256], sizes = [8, 128], strides = [1, 1]} : vector<8x512xf32> to vector<8x128xf32>
    %37 = math.tanh %36 : vector<8x128xf32>
    %38 = vector.extract_strided_slice %19 {offsets = [0, 384], sizes = [8, 128], strides = [1, 1]} : vector<8x512xf32> to vector<8x128xf32>
    %cst_26 = arith.constant 5.000000e-01 : f32
    %39 = vector.broadcast %cst_26 : f32 to vector<8x128xf32>
    %40 = arith.mulf %39, %38 : vector<8x128xf32>
    %41 = math.tanh %40 : vector<8x128xf32>
    %cst_27 = arith.constant 5.000000e-01 : f32
    %42 = vector.broadcast %cst_27 : f32 to vector<8x128xf32>
    %43 = arith.mulf %42, %41 : vector<8x128xf32>
    %cst_28 = arith.constant 5.000000e-01 : f32
    %44 = vector.broadcast %cst_28 : f32 to vector<8x128xf32>
    %45 = arith.addf %43, %44 : vector<8x128xf32>
    %46 = arith.mulf %27, %14 : vector<8x128xf32>
    %47 = arith.mulf %35, %37 : vector<8x128xf32>
    %48 = arith.addf %46, %47 : vector<8x128xf32>
    %49 = math.tanh %48 : vector<8x128xf32>
    %50 = arith.mulf %45, %49 : vector<8x128xf32>
    %51 = arith.index_cast %c0_i32_16 : i32 to index
    %c0_29 = arith.constant 0 : index
    %c0_30 = arith.constant 0 : index
    %52 = vector.load %arg6[%51, %c0_29, %c0_30] : memref<8x8x128xf32, #tpu.memory_space<vmem>>, vector<1x8x128xf32>
    %53 = vector.shape_cast %52 : vector<1x8x128xf32> to vector<8x128xf32>
    %54 = vector.shape_cast %50 : vector<8x128xf32> to vector<1x8x128xf32>
    tpu.vector_store %arg6[%51, %c0_29, %c0_30], %54 {strides = array<i32>} : memref<8x8x128xf32, #tpu.memory_space<vmem>>, vector<1x8x128xf32>,
    %55 = arith.truncf %50 : vector<8x128xf32> to vector<8x128xbf16>
    %c1_i32 = arith.constant 1 : i32
    %cst_31 = arith.constant dense<0.000000e+00> : vector<8x512xf32>
    %56 = tpu.matmul %55, %12, %cst_31 {dimension_numbers = #tpu.dot_dimension_numbers<[1], [0], [0], [1], [0, 0, 1, 1], [], []>} : vector<8x128xbf16>, vector<128x512xbf16>, vector<8x512xf32> -> vector<8x512xf32>
    %57 = arith.index_cast %c1_i32 : i32 to index
    %c0_32 = arith.constant 0 : index
    %c0_33 = arith.constant 0 : index
    %58 = vector.load %arg7[%57, %c0_32, %c0_33] : memref<8x8x512xf32, #tpu.memory_space<vmem>>, vector<1x8x512xf32>
    %59 = vector.shape_cast %58 : vector<1x8x512xf32> to vector<8x512xf32>
    %60 = arith.addf %56, %59 : vector<8x512xf32>
    %61 = vector.extract_strided_slice %60 {offsets = [0, 0], sizes = [8, 128], strides = [1, 1]} : vector<8x512xf32> to vector<8x128xf32>
    %cst_34 = arith.constant 5.000000e-01 : f32
    %62 = vector.broadcast %cst_34 : f32 to vector<8x128xf32>
    %63 = arith.mulf %62, %61 : vector<8x128xf32>
    %64 = math.tanh %63 : vector<8x128xf32>
    %cst_35 = arith.constant 5.000000e-01 : f32
    %65 = vector.broadcast %cst_35 : f32 to vector<8x128xf32>
    %66 = arith.mulf %65, %64 : vector<8x128xf32>
    %cst_36 = arith.constant 5.000000e-01 : f32
    %67 = vector.broadcast %cst_36 : f32 to vector<8x128xf32>
    %68 = arith.addf %66, %67 : vector<8x128xf32>
    %69 = vector.extract_strided_slice %60 {offsets = [0, 128], sizes = [8, 128], strides = [1, 1]} : vector<8x512xf32> to vector<8x128xf32>
    %cst_37 = arith.constant 5.000000e-01 : f32
    %70 = vector.broadcast %cst_37 : f32 to vector<8x128xf32>
    %71 = arith.mulf %70, %69 : vector<8x128xf32>
    %72 = math.tanh %71 : vector<8x128xf32>
    %cst_38 = arith.constant 5.000000e-01 : f32
    %73 = vector.broadcast %cst_38 : f32 to vector<8x128xf32>
    %74 = arith.mulf %73, %72 : vector<8x128xf32>
    %cst_39 = arith.constant 5.000000e-01 : f32
    %75 = vector.broadcast %cst_39 : f32 to vector<8x128xf32>
    %76 = arith.addf %74, %75 : vector<8x128xf32>
    %77 = vector.extract_strided_slice %60 {offsets = [0, 256], sizes = [8, 128], strides = [1, 1]} : vector<8x512xf32> to vector<8x128xf32>
    %78 = math.tanh %77 : vector<8x128xf32>
    %79 = vector.extract_strided_slice %60 {offsets = [0, 384], sizes = [8, 128], strides = [1, 1]} : vector<8x512xf32> to vector<8x128xf32>
    %cst_40 = arith.constant 5.000000e-01 : f32
    %80 = vector.broadcast %cst_40 : f32 to vector<8x128xf32>
    %81 = arith.mulf %80, %79 : vector<8x128xf32>
    %82 = math.tanh %81 : vector<8x128xf32>
    %cst_41 = arith.constant 5.000000e-01 : f32
    %83 = vector.broadcast %cst_41 : f32 to vector<8x128xf32>
    %84 = arith.mulf %83, %82 : vector<8x128xf32>
    %cst_42 = arith.constant 5.000000e-01 : f32
    %85 = vector.broadcast %cst_42 : f32 to vector<8x128xf32>
    %86 = arith.addf %84, %85 : vector<8x128xf32>
    %87 = arith.mulf %68, %48 : vector<8x128xf32>
    %88 = arith.mulf %76, %78 : vector<8x128xf32>
    %89 = arith.addf %87, %88 : vector<8x128xf32>
    %90 = math.tanh %89 : vector<8x128xf32>
    %91 = arith.mulf %86, %90 : vector<8x128xf32>
    %92 = arith.index_cast %c1_i32 : i32 to index
    %c0_43 = arith.constant 0 : index
    %c0_44 = arith.constant 0 : index
    %93 = vector.load %arg6[%92, %c0_43, %c0_44] : memref<8x8x128xf32, #tpu.memory_space<vmem>>, vector<1x8x128xf32>
    %94 = vector.shape_cast %93 : vector<1x8x128xf32> to vector<8x128xf32>
    %95 = vector.shape_cast %91 : vector<8x128xf32> to vector<1x8x128xf32>
    tpu.vector_store %arg6[%92, %c0_43, %c0_44], %95 {strides = array<i32>} : memref<8x8x128xf32, #tpu.memory_space<vmem>>, vector<1x8x128xf32>,
    %96 = arith.truncf %91 : vector<8x128xf32> to vector<8x128xbf16>
    %c2_i32 = arith.constant 2 : i32
    %cst_45 = arith.constant dense<0.000000e+00> : vector<8x512xf32>
    %97 = tpu.matmul %96, %12, %cst_45 {dimension_numbers = #tpu.dot_dimension_numbers<[1], [0], [0], [1], [0, 0, 1, 1], [], []>} : vector<8x128xbf16>, vector<128x512xbf16>, vector<8x512xf32> -> vector<8x512xf32>
    %98 = arith.index_cast %c2_i32 : i32 to index
    %c0_46 = arith.constant 0 : index
    %c0_47 = arith.constant 0 : index
    %99 = vector.load %arg7[%98, %c0_46, %c0_47] : memref<8x8x512xf32, #tpu.memory_space<vmem>>, vector<1x8x512xf32>
    %100 = vector.shape_cast %99 : vector<1x8x512xf32> to vector<8x512xf32>
    %101 = arith.addf %97, %100 : vector<8x512xf32>
    %102 = vector.extract_strided_slice %101 {offsets = [0, 0], sizes = [8, 128], strides = [1, 1]} : vector<8x512xf32> to vector<8x128xf32>
    %cst_48 = arith.constant 5.000000e-01 : f32
    %103 = vector.broadcast %cst_48 : f32 to vector<8x128xf32>
    %104 = arith.mulf %103, %102 : vector<8x128xf32>
    %105 = math.tanh %104 : vector<8x128xf32>
    %cst_49 = arith.constant 5.000000e-01 : f32
    %106 = vector.broadcast %cst_49 : f32 to vector<8x128xf32>
    %107 = arith.mulf %106, %105 : vector<8x128xf32>
    %cst_50 = arith.constant 5.000000e-01 : f32
    %108 = vector.broadcast %cst_50 : f32 to vector<8x128xf32>
    %109 = arith.addf %107, %108 : vector<8x128xf32>
    %110 = vector.extract_strided_slice %101 {offsets = [0, 128], sizes = [8, 128], strides = [1, 1]} : vector<8x512xf32> to vector<8x128xf32>
    %cst_51 = arith.constant 5.000000e-01 : f32
    %111 = vector.broadcast %cst_51 : f32 to vector<8x128xf32>
    %112 = arith.mulf %111, %110 : vector<8x128xf32>
    %113 = math.tanh %112 : vector<8x128xf32>
    %cst_52 = arith.constant 5.000000e-01 : f32
    %114 = vector.broadcast %cst_52 : f32 to vector<8x128xf32>
    %115 = arith.mulf %114, %113 : vector<8x128xf32>
    %cst_53 = arith.constant 5.000000e-01 : f32
    %116 = vector.broadcast %cst_53 : f32 to vector<8x128xf32>
    %117 = arith.addf %115, %116 : vector<8x128xf32>
    %118 = vector.extract_strided_slice %101 {offsets = [0, 256], sizes = [8, 128], strides = [1, 1]} : vector<8x512xf32> to vector<8x128xf32>
    %119 = math.tanh %118 : vector<8x128xf32>
    %120 = vector.extract_strided_slice %101 {offsets = [0, 384], sizes = [8, 128], strides = [1, 1]} : vector<8x512xf32> to vector<8x128xf32>
    %cst_54 = arith.constant 5.000000e-01 : f32
    %121 = vector.broadcast %cst_54 : f32 to vector<8x128xf32>
    %122 = arith.mulf %121, %120 : vector<8x128xf32>
    %123 = math.tanh %122 : vector<8x128xf32>
    %cst_55 = arith.constant 5.000000e-01 : f32
    %124 = vector.broadcast %cst_55 : f32 to vector<8x128xf32>
    %125 = arith.mulf %124, %123 : vector<8x128xf32>
    %cst_56 = arith.constant 5.000000e-01 : f32
    %126 = vector.broadcast %cst_56 : f32 to vector<8x128xf32>
    %127 = arith.addf %125, %126 : vector<8x128xf32>
    %128 = arith.mulf %109, %89 : vector<8x128xf32>
    %129 = arith.mulf %117, %119 : vector<8x128xf32>
    %130 = arith.addf %128, %129 : vector<8x128xf32>
    %131 = math.tanh %130 : vector<8x128xf32>
    %132 = arith.mulf %127, %131 : vector<8x128xf32>
    %133 = arith.index_cast %c2_i32 : i32 to index
    %c0_57 = arith.constant 0 : index
    %c0_58 = arith.constant 0 : index
    %134 = vector.load %arg6[%133, %c0_57, %c0_58] : memref<8x8x128xf32, #tpu.memory_space<vmem>>, vector<1x8x128xf32>
    %135 = vector.shape_cast %134 : vector<1x8x128xf32> to vector<8x128xf32>
    %136 = vector.shape_cast %132 : vector<8x128xf32> to vector<1x8x128xf32>
    tpu.vector_store %arg6[%133, %c0_57, %c0_58], %136 {strides = array<i32>} : memref<8x8x128xf32, #tpu.memory_space<vmem>>, vector<1x8x128xf32>,
    %137 = arith.truncf %132 : vector<8x128xf32> to vector<8x128xbf16>
    %c3_i32 = arith.constant 3 : i32
    %cst_59 = arith.constant dense<0.000000e+00> : vector<8x512xf32>
    %138 = tpu.matmul %137, %12, %cst_59 {dimension_numbers = #tpu.dot_dimension_numbers<[1], [0], [0], [1], [0, 0, 1, 1], [], []>} : vector<8x128xbf16>, vector<128x512xbf16>, vector<8x512xf32> -> vector<8x512xf32>
    %139 = arith.index_cast %c3_i32 : i32 to index
    %c0_60 = arith.constant 0 : index
    %c0_61 = arith.constant 0 : index
    %140 = vector.load %arg7[%139, %c0_60, %c0_61] : memref<8x8x512xf32, #tpu.memory_space<vmem>>, vector<1x8x512xf32>
    %141 = vector.shape_cast %140 : vector<1x8x512xf32> to vector<8x512xf32>
    %142 = arith.addf %138, %141 : vector<8x512xf32>
    %143 = vector.extract_strided_slice %142 {offsets = [0, 0], sizes = [8, 128], strides = [1, 1]} : vector<8x512xf32> to vector<8x128xf32>
    %cst_62 = arith.constant 5.000000e-01 : f32
    %144 = vector.broadcast %cst_62 : f32 to vector<8x128xf32>
    %145 = arith.mulf %144, %143 : vector<8x128xf32>
    %146 = math.tanh %145 : vector<8x128xf32>
    %cst_63 = arith.constant 5.000000e-01 : f32
    %147 = vector.broadcast %cst_63 : f32 to vector<8x128xf32>
    %148 = arith.mulf %147, %146 : vector<8x128xf32>
    %cst_64 = arith.constant 5.000000e-01 : f32
    %149 = vector.broadcast %cst_64 : f32 to vector<8x128xf32>
    %150 = arith.addf %148, %149 : vector<8x128xf32>
    %151 = vector.extract_strided_slice %142 {offsets = [0, 128], sizes = [8, 128], strides = [1, 1]} : vector<8x512xf32> to vector<8x128xf32>
    %cst_65 = arith.constant 5.000000e-01 : f32
    %152 = vector.broadcast %cst_65 : f32 to vector<8x128xf32>
    %153 = arith.mulf %152, %151 : vector<8x128xf32>
    %154 = math.tanh %153 : vector<8x128xf32>
    %cst_66 = arith.constant 5.000000e-01 : f32
    %155 = vector.broadcast %cst_66 : f32 to vector<8x128xf32>
    %156 = arith.mulf %155, %154 : vector<8x128xf32>
    %cst_67 = arith.constant 5.000000e-01 : f32
    %157 = vector.broadcast %cst_67 : f32 to vector<8x128xf32>
    %158 = arith.addf %156, %157 : vector<8x128xf32>
    %159 = vector.extract_strided_slice %142 {offsets = [0, 256], sizes = [8, 128], strides = [1, 1]} : vector<8x512xf32> to vector<8x128xf32>
    %160 = math.tanh %159 : vector<8x128xf32>
    %161 = vector.extract_strided_slice %142 {offsets = [0, 384], sizes = [8, 128], strides = [1, 1]} : vector<8x512xf32> to vector<8x128xf32>
    %cst_68 = arith.constant 5.000000e-01 : f32
    %162 = vector.broadcast %cst_68 : f32 to vector<8x128xf32>
    %163 = arith.mulf %162, %161 : vector<8x128xf32>
    %164 = math.tanh %163 : vector<8x128xf32>
    %cst_69 = arith.constant 5.000000e-01 : f32
    %165 = vector.broadcast %cst_69 : f32 to vector<8x128xf32>
    %166 = arith.mulf %165, %164 : vector<8x128xf32>
    %cst_70 = arith.constant 5.000000e-01 : f32
    %167 = vector.broadcast %cst_70 : f32 to vector<8x128xf32>
    %168 = arith.addf %166, %167 : vector<8x128xf32>
    %169 = arith.mulf %150, %130 : vector<8x128xf32>
    %170 = arith.mulf %158, %160 : vector<8x128xf32>
    %171 = arith.addf %169, %170 : vector<8x128xf32>
    %172 = math.tanh %171 : vector<8x128xf32>
    %173 = arith.mulf %168, %172 : vector<8x128xf32>
    %174 = arith.index_cast %c3_i32 : i32 to index
    %c0_71 = arith.constant 0 : index
    %c0_72 = arith.constant 0 : index
    %175 = vector.load %arg6[%174, %c0_71, %c0_72] : memref<8x8x128xf32, #tpu.memory_space<vmem>>, vector<1x8x128xf32>
    %176 = vector.shape_cast %175 : vector<1x8x128xf32> to vector<8x128xf32>
    %177 = vector.shape_cast %173 : vector<8x128xf32> to vector<1x8x128xf32>
    tpu.vector_store %arg6[%174, %c0_71, %c0_72], %177 {strides = array<i32>} : memref<8x8x128xf32, #tpu.memory_space<vmem>>, vector<1x8x128xf32>,
    %178 = arith.truncf %173 : vector<8x128xf32> to vector<8x128xbf16>
    %c4_i32 = arith.constant 4 : i32
    %cst_73 = arith.constant dense<0.000000e+00> : vector<8x512xf32>
    %179 = tpu.matmul %178, %12, %cst_73 {dimension_numbers = #tpu.dot_dimension_numbers<[1], [0], [0], [1], [0, 0, 1, 1], [], []>} : vector<8x128xbf16>, vector<128x512xbf16>, vector<8x512xf32> -> vector<8x512xf32>
    %180 = arith.index_cast %c4_i32 : i32 to index
    %c0_74 = arith.constant 0 : index
    %c0_75 = arith.constant 0 : index
    %181 = vector.load %arg7[%180, %c0_74, %c0_75] : memref<8x8x512xf32, #tpu.memory_space<vmem>>, vector<1x8x512xf32>
    %182 = vector.shape_cast %181 : vector<1x8x512xf32> to vector<8x512xf32>
    %183 = arith.addf %179, %182 : vector<8x512xf32>
    %184 = vector.extract_strided_slice %183 {offsets = [0, 0], sizes = [8, 128], strides = [1, 1]} : vector<8x512xf32> to vector<8x128xf32>
    %cst_76 = arith.constant 5.000000e-01 : f32
    %185 = vector.broadcast %cst_76 : f32 to vector<8x128xf32>
    %186 = arith.mulf %185, %184 : vector<8x128xf32>
    %187 = math.tanh %186 : vector<8x128xf32>
    %cst_77 = arith.constant 5.000000e-01 : f32
    %188 = vector.broadcast %cst_77 : f32 to vector<8x128xf32>
    %189 = arith.mulf %188, %187 : vector<8x128xf32>
    %cst_78 = arith.constant 5.000000e-01 : f32
    %190 = vector.broadcast %cst_78 : f32 to vector<8x128xf32>
    %191 = arith.addf %189, %190 : vector<8x128xf32>
    %192 = vector.extract_strided_slice %183 {offsets = [0, 128], sizes = [8, 128], strides = [1, 1]} : vector<8x512xf32> to vector<8x128xf32>
    %cst_79 = arith.constant 5.000000e-01 : f32
    %193 = vector.broadcast %cst_79 : f32 to vector<8x128xf32>
    %194 = arith.mulf %193, %192 : vector<8x128xf32>
    %195 = math.tanh %194 : vector<8x128xf32>
    %cst_80 = arith.constant 5.000000e-01 : f32
    %196 = vector.broadcast %cst_80 : f32 to vector<8x128xf32>
    %197 = arith.mulf %196, %195 : vector<8x128xf32>
    %cst_81 = arith.constant 5.000000e-01 : f32
    %198 = vector.broadcast %cst_81 : f32 to vector<8x128xf32>
    %199 = arith.addf %197, %198 : vector<8x128xf32>
    %200 = vector.extract_strided_slice %183 {offsets = [0, 256], sizes = [8, 128], strides = [1, 1]} : vector<8x512xf32> to vector<8x128xf32>
    %201 = math.tanh %200 : vector<8x128xf32>
    %202 = vector.extract_strided_slice %183 {offsets = [0, 384], sizes = [8, 128], strides = [1, 1]} : vector<8x512xf32> to vector<8x128xf32>
    %cst_82 = arith.constant 5.000000e-01 : f32
    %203 = vector.broadcast %cst_82 : f32 to vector<8x128xf32>
    %204 = arith.mulf %203, %202 : vector<8x128xf32>
    %205 = math.tanh %204 : vector<8x128xf32>
    %cst_83 = arith.constant 5.000000e-01 : f32
    %206 = vector.broadcast %cst_83 : f32 to vector<8x128xf32>
    %207 = arith.mulf %206, %205 : vector<8x128xf32>
    %cst_84 = arith.constant 5.000000e-01 : f32
    %208 = vector.broadcast %cst_84 : f32 to vector<8x128xf32>
    %209 = arith.addf %207, %208 : vector<8x128xf32>
    %210 = arith.mulf %191, %171 : vector<8x128xf32>
    %211 = arith.mulf %199, %201 : vector<8x128xf32>
    %212 = arith.addf %210, %211 : vector<8x128xf32>
    %213 = math.tanh %212 : vector<8x128xf32>
    %214 = arith.mulf %209, %213 : vector<8x128xf32>
    %215 = arith.index_cast %c4_i32 : i32 to index
    %c0_85 = arith.constant 0 : index
    %c0_86 = arith.constant 0 : index
    %216 = vector.load %arg6[%215, %c0_85, %c0_86] : memref<8x8x128xf32, #tpu.memory_space<vmem>>, vector<1x8x128xf32>
    %217 = vector.shape_cast %216 : vector<1x8x128xf32> to vector<8x128xf32>
    %218 = vector.shape_cast %214 : vector<8x128xf32> to vector<1x8x128xf32>
    tpu.vector_store %arg6[%215, %c0_85, %c0_86], %218 {strides = array<i32>} : memref<8x8x128xf32, #tpu.memory_space<vmem>>, vector<1x8x128xf32>,
    %219 = arith.truncf %214 : vector<8x128xf32> to vector<8x128xbf16>
    %c5_i32 = arith.constant 5 : i32
    %cst_87 = arith.constant dense<0.000000e+00> : vector<8x512xf32>
    %220 = tpu.matmul %219, %12, %cst_87 {dimension_numbers = #tpu.dot_dimension_numbers<[1], [0], [0], [1], [0, 0, 1, 1], [], []>} : vector<8x128xbf16>, vector<128x512xbf16>, vector<8x512xf32> -> vector<8x512xf32>
    %221 = arith.index_cast %c5_i32 : i32 to index
    %c0_88 = arith.constant 0 : index
    %c0_89 = arith.constant 0 : index
    %222 = vector.load %arg7[%221, %c0_88, %c0_89] : memref<8x8x512xf32, #tpu.memory_space<vmem>>, vector<1x8x512xf32>
    %223 = vector.shape_cast %222 : vector<1x8x512xf32> to vector<8x512xf32>
    %224 = arith.addf %220, %223 : vector<8x512xf32>
    %225 = vector.extract_strided_slice %224 {offsets = [0, 0], sizes = [8, 128], strides = [1, 1]} : vector<8x512xf32> to vector<8x128xf32>
    %cst_90 = arith.constant 5.000000e-01 : f32
    %226 = vector.broadcast %cst_90 : f32 to vector<8x128xf32>
    %227 = arith.mulf %226, %225 : vector<8x128xf32>
    %228 = math.tanh %227 : vector<8x128xf32>
    %cst_91 = arith.constant 5.000000e-01 : f32
    %229 = vector.broadcast %cst_91 : f32 to vector<8x128xf32>
    %230 = arith.mulf %229, %228 : vector<8x128xf32>
    %cst_92 = arith.constant 5.000000e-01 : f32
    %231 = vector.broadcast %cst_92 : f32 to vector<8x128xf32>
    %232 = arith.addf %230, %231 : vector<8x128xf32>
    %233 = vector.extract_strided_slice %224 {offsets = [0, 128], sizes = [8, 128], strides = [1, 1]} : vector<8x512xf32> to vector<8x128xf32>
    %cst_93 = arith.constant 5.000000e-01 : f32
    %234 = vector.broadcast %cst_93 : f32 to vector<8x128xf32>
    %235 = arith.mulf %234, %233 : vector<8x128xf32>
    %236 = math.tanh %235 : vector<8x128xf32>
    %cst_94 = arith.constant 5.000000e-01 : f32
    %237 = vector.broadcast %cst_94 : f32 to vector<8x128xf32>
    %238 = arith.mulf %237, %236 : vector<8x128xf32>
    %cst_95 = arith.constant 5.000000e-01 : f32
    %239 = vector.broadcast %cst_95 : f32 to vector<8x128xf32>
    %240 = arith.addf %238, %239 : vector<8x128xf32>
    %241 = vector.extract_strided_slice %224 {offsets = [0, 256], sizes = [8, 128], strides = [1, 1]} : vector<8x512xf32> to vector<8x128xf32>
    %242 = math.tanh %241 : vector<8x128xf32>
    %243 = vector.extract_strided_slice %224 {offsets = [0, 384], sizes = [8, 128], strides = [1, 1]} : vector<8x512xf32> to vector<8x128xf32>
    %cst_96 = arith.constant 5.000000e-01 : f32
    %244 = vector.broadcast %cst_96 : f32 to vector<8x128xf32>
    %245 = arith.mulf %244, %243 : vector<8x128xf32>
    %246 = math.tanh %245 : vector<8x128xf32>
    %cst_97 = arith.constant 5.000000e-01 : f32
    %247 = vector.broadcast %cst_97 : f32 to vector<8x128xf32>
    %248 = arith.mulf %247, %246 : vector<8x128xf32>
    %cst_98 = arith.constant 5.000000e-01 : f32
    %249 = vector.broadcast %cst_98 : f32 to vector<8x128xf32>
    %250 = arith.addf %248, %249 : vector<8x128xf32>
    %251 = arith.mulf %232, %212 : vector<8x128xf32>
    %252 = arith.mulf %240, %242 : vector<8x128xf32>
    %253 = arith.addf %251, %252 : vector<8x128xf32>
    %254 = math.tanh %253 : vector<8x128xf32>
    %255 = arith.mulf %250, %254 : vector<8x128xf32>
    %256 = arith.index_cast %c5_i32 : i32 to index
    %c0_99 = arith.constant 0 : index
    %c0_100 = arith.constant 0 : index
    %257 = vector.load %arg6[%256, %c0_99, %c0_100] : memref<8x8x128xf32, #tpu.memory_space<vmem>>, vector<1x8x128xf32>
    %258 = vector.shape_cast %257 : vector<1x8x128xf32> to vector<8x128xf32>
    %259 = vector.shape_cast %255 : vector<8x128xf32> to vector<1x8x128xf32>
    tpu.vector_store %arg6[%256, %c0_99, %c0_100], %259 {strides = array<i32>} : memref<8x8x128xf32, #tpu.memory_space<vmem>>, vector<1x8x128xf32>,
    %260 = arith.truncf %255 : vector<8x128xf32> to vector<8x128xbf16>
    %c6_i32 = arith.constant 6 : i32
    %cst_101 = arith.constant dense<0.000000e+00> : vector<8x512xf32>
    %261 = tpu.matmul %260, %12, %cst_101 {dimension_numbers = #tpu.dot_dimension_numbers<[1], [0], [0], [1], [0, 0, 1, 1], [], []>} : vector<8x128xbf16>, vector<128x512xbf16>, vector<8x512xf32> -> vector<8x512xf32>
    %262 = arith.index_cast %c6_i32 : i32 to index
    %c0_102 = arith.constant 0 : index
    %c0_103 = arith.constant 0 : index
    %263 = vector.load %arg7[%262, %c0_102, %c0_103] : memref<8x8x512xf32, #tpu.memory_space<vmem>>, vector<1x8x512xf32>
    %264 = vector.shape_cast %263 : vector<1x8x512xf32> to vector<8x512xf32>
    %265 = arith.addf %261, %264 : vector<8x512xf32>
    %266 = vector.extract_strided_slice %265 {offsets = [0, 0], sizes = [8, 128], strides = [1, 1]} : vector<8x512xf32> to vector<8x128xf32>
    %cst_104 = arith.constant 5.000000e-01 : f32
    %267 = vector.broadcast %cst_104 : f32 to vector<8x128xf32>
    %268 = arith.mulf %267, %266 : vector<8x128xf32>
    %269 = math.tanh %268 : vector<8x128xf32>
    %cst_105 = arith.constant 5.000000e-01 : f32
    %270 = vector.broadcast %cst_105 : f32 to vector<8x128xf32>
    %271 = arith.mulf %270, %269 : vector<8x128xf32>
    %cst_106 = arith.constant 5.000000e-01 : f32
    %272 = vector.broadcast %cst_106 : f32 to vector<8x128xf32>
    %273 = arith.addf %271, %272 : vector<8x128xf32>
    %274 = vector.extract_strided_slice %265 {offsets = [0, 128], sizes = [8, 128], strides = [1, 1]} : vector<8x512xf32> to vector<8x128xf32>
    %cst_107 = arith.constant 5.000000e-01 : f32
    %275 = vector.broadcast %cst_107 : f32 to vector<8x128xf32>
    %276 = arith.mulf %275, %274 : vector<8x128xf32>
    %277 = math.tanh %276 : vector<8x128xf32>
    %cst_108 = arith.constant 5.000000e-01 : f32
    %278 = vector.broadcast %cst_108 : f32 to vector<8x128xf32>
    %279 = arith.mulf %278, %277 : vector<8x128xf32>
    %cst_109 = arith.constant 5.000000e-01 : f32
    %280 = vector.broadcast %cst_109 : f32 to vector<8x128xf32>
    %281 = arith.addf %279, %280 : vector<8x128xf32>
    %282 = vector.extract_strided_slice %265 {offsets = [0, 256], sizes = [8, 128], strides = [1, 1]} : vector<8x512xf32> to vector<8x128xf32>
    %283 = math.tanh %282 : vector<8x128xf32>
    %284 = vector.extract_strided_slice %265 {offsets = [0, 384], sizes = [8, 128], strides = [1, 1]} : vector<8x512xf32> to vector<8x128xf32>
    %cst_110 = arith.constant 5.000000e-01 : f32
    %285 = vector.broadcast %cst_110 : f32 to vector<8x128xf32>
    %286 = arith.mulf %285, %284 : vector<8x128xf32>
    %287 = math.tanh %286 : vector<8x128xf32>
    %cst_111 = arith.constant 5.000000e-01 : f32
    %288 = vector.broadcast %cst_111 : f32 to vector<8x128xf32>
    %289 = arith.mulf %288, %287 : vector<8x128xf32>
    %cst_112 = arith.constant 5.000000e-01 : f32
    %290 = vector.broadcast %cst_112 : f32 to vector<8x128xf32>
    %291 = arith.addf %289, %290 : vector<8x128xf32>
    %292 = arith.mulf %273, %253 : vector<8x128xf32>
    %293 = arith.mulf %281, %283 : vector<8x128xf32>
    %294 = arith.addf %292, %293 : vector<8x128xf32>
    %295 = math.tanh %294 : vector<8x128xf32>
    %296 = arith.mulf %291, %295 : vector<8x128xf32>
    %297 = arith.index_cast %c6_i32 : i32 to index
    %c0_113 = arith.constant 0 : index
    %c0_114 = arith.constant 0 : index
    %298 = vector.load %arg6[%297, %c0_113, %c0_114] : memref<8x8x128xf32, #tpu.memory_space<vmem>>, vector<1x8x128xf32>
    %299 = vector.shape_cast %298 : vector<1x8x128xf32> to vector<8x128xf32>
    %300 = vector.shape_cast %296 : vector<8x128xf32> to vector<1x8x128xf32>
    tpu.vector_store %arg6[%297, %c0_113, %c0_114], %300 {strides = array<i32>} : memref<8x8x128xf32, #tpu.memory_space<vmem>>, vector<1x8x128xf32>,
    %301 = arith.truncf %296 : vector<8x128xf32> to vector<8x128xbf16>
    %c7_i32 = arith.constant 7 : i32
    %cst_115 = arith.constant dense<0.000000e+00> : vector<8x512xf32>
    %302 = tpu.matmul %301, %12, %cst_115 {dimension_numbers = #tpu.dot_dimension_numbers<[1], [0], [0], [1], [0, 0, 1, 1], [], []>} : vector<8x128xbf16>, vector<128x512xbf16>, vector<8x512xf32> -> vector<8x512xf32>
    %303 = arith.index_cast %c7_i32 : i32 to index
    %c0_116 = arith.constant 0 : index
    %c0_117 = arith.constant 0 : index
    %304 = vector.load %arg7[%303, %c0_116, %c0_117] : memref<8x8x512xf32, #tpu.memory_space<vmem>>, vector<1x8x512xf32>
    %305 = vector.shape_cast %304 : vector<1x8x512xf32> to vector<8x512xf32>
    %306 = arith.addf %302, %305 : vector<8x512xf32>
    %307 = vector.extract_strided_slice %306 {offsets = [0, 0], sizes = [8, 128], strides = [1, 1]} : vector<8x512xf32> to vector<8x128xf32>
    %cst_118 = arith.constant 5.000000e-01 : f32
    %308 = vector.broadcast %cst_118 : f32 to vector<8x128xf32>
    %309 = arith.mulf %308, %307 : vector<8x128xf32>
    %310 = math.tanh %309 : vector<8x128xf32>
    %cst_119 = arith.constant 5.000000e-01 : f32
    %311 = vector.broadcast %cst_119 : f32 to vector<8x128xf32>
    %312 = arith.mulf %311, %310 : vector<8x128xf32>
    %cst_120 = arith.constant 5.000000e-01 : f32
    %313 = vector.broadcast %cst_120 : f32 to vector<8x128xf32>
    %314 = arith.addf %312, %313 : vector<8x128xf32>
    %315 = vector.extract_strided_slice %306 {offsets = [0, 128], sizes = [8, 128], strides = [1, 1]} : vector<8x512xf32> to vector<8x128xf32>
    %cst_121 = arith.constant 5.000000e-01 : f32
    %316 = vector.broadcast %cst_121 : f32 to vector<8x128xf32>
    %317 = arith.mulf %316, %315 : vector<8x128xf32>
    %318 = math.tanh %317 : vector<8x128xf32>
    %cst_122 = arith.constant 5.000000e-01 : f32
    %319 = vector.broadcast %cst_122 : f32 to vector<8x128xf32>
    %320 = arith.mulf %319, %318 : vector<8x128xf32>
    %cst_123 = arith.constant 5.000000e-01 : f32
    %321 = vector.broadcast %cst_123 : f32 to vector<8x128xf32>
    %322 = arith.addf %320, %321 : vector<8x128xf32>
    %323 = vector.extract_strided_slice %306 {offsets = [0, 256], sizes = [8, 128], strides = [1, 1]} : vector<8x512xf32> to vector<8x128xf32>
    %324 = math.tanh %323 : vector<8x128xf32>
    %325 = vector.extract_strided_slice %306 {offsets = [0, 384], sizes = [8, 128], strides = [1, 1]} : vector<8x512xf32> to vector<8x128xf32>
    %cst_124 = arith.constant 5.000000e-01 : f32
    %326 = vector.broadcast %cst_124 : f32 to vector<8x128xf32>
    %327 = arith.mulf %326, %325 : vector<8x128xf32>
    %328 = math.tanh %327 : vector<8x128xf32>
    %cst_125 = arith.constant 5.000000e-01 : f32
    %329 = vector.broadcast %cst_125 : f32 to vector<8x128xf32>
    %330 = arith.mulf %329, %328 : vector<8x128xf32>
    %cst_126 = arith.constant 5.000000e-01 : f32
    %331 = vector.broadcast %cst_126 : f32 to vector<8x128xf32>
    %332 = arith.addf %330, %331 : vector<8x128xf32>
    %333 = arith.mulf %314, %294 : vector<8x128xf32>
    %334 = arith.mulf %322, %324 : vector<8x128xf32>
    %335 = arith.addf %333, %334 : vector<8x128xf32>
    %336 = math.tanh %335 : vector<8x128xf32>
    %337 = arith.mulf %332, %336 : vector<8x128xf32>
    %338 = arith.index_cast %c7_i32 : i32 to index
    %c0_127 = arith.constant 0 : index
    %c0_128 = arith.constant 0 : index
    %339 = vector.load %arg6[%338, %c0_127, %c0_128] : memref<8x8x128xf32, #tpu.memory_space<vmem>>, vector<1x8x128xf32>
    %340 = vector.shape_cast %339 : vector<1x8x128xf32> to vector<8x128xf32>
    %341 = vector.shape_cast %337 : vector<8x128xf32> to vector<1x8x128xf32>
    tpu.vector_store %arg6[%338, %c0_127, %c0_128], %341 {strides = array<i32>} : memref<8x8x128xf32, #tpu.memory_space<vmem>>, vector<1x8x128xf32>,
    %342 = arith.truncf %337 : vector<8x128xf32> to vector<8x128xbf16>
    %c8_i32 = arith.constant 8 : i32
    %c0_129 = arith.constant 0 : index
    %c0_130 = arith.constant 0 : index
    %343 = vector.load %arg8[%c0_129, %c0_130] : memref<8x128xbf16, #tpu.memory_space<vmem>>, vector<8x128xbf16>
    tpu.vector_store %arg8[%c0_129, %c0_130], %342 {strides = array<i32>} : memref<8x128xbf16, #tpu.memory_space<vmem>>, vector<8x128xbf16>,
    %c0_131 = arith.constant 0 : index
    %c0_132 = arith.constant 0 : index
    %344 = vector.load %arg9[%c0_131, %c0_132] : memref<8x128xf32, #tpu.memory_space<vmem>>, vector<8x128xf32>
    tpu.vector_store %arg9[%c0_131, %c0_132], %335 {strides = array<i32>} : memref<8x128xf32, #tpu.memory_space<vmem>>, vector<8x128xf32>,
    return
  }
  func.func @transform_0(%arg0: i32, %arg1: i32) -> (i32, i32, i32) {
    %c0_i32 = arith.constant 0 : i32
    %c0_i32_0 = arith.constant 0 : i32
    return %arg1, %arg0, %c0_i32 : i32, i32, i32
  }
  func.func @transform_1(%arg0: i32, %arg1: i32) -> (i32, i32) {
    %c0_i32 = arith.constant 0 : i32
    %c0_i32_0 = arith.constant 0 : i32
    %c0_i32_1 = arith.constant 0 : i32
    return %c0_i32, %c0_i32_0 : i32, i32
  }
  func.func @transform_2(%arg0: i32, %arg1: i32) -> (i32, i32) {
    %c0_i32 = arith.constant 0 : i32
    %c0_i32_0 = arith.constant 0 : i32
    %c0_i32_1 = arith.constant 0 : i32
    return %c0_i32, %c0_i32_0 : i32, i32
  }
  func.func @transform_3(%arg0: i32, %arg1: i32) -> (i32, i32) {
    %c0_i32 = arith.constant 0 : i32
    %c0_i32_0 = arith.constant 0 : i32
    %c0_i32_1 = arith.constant 0 : i32
    return %c0_i32, %c0_i32_0 : i32, i32
  }
  func.func @transform_4(%arg0: i32, %arg1: i32) -> (i32, i32, i32) {
    %c0_i32 = arith.constant 0 : i32
    %c0_i32_0 = arith.constant 0 : i32
    return %arg1, %arg0, %c0_i32 : i32, i32, i32
  }
}

</mosaic_0001>

<llo_original>
// kernel: tpu_custom_call.1
$region0: #{tpu_custom_call.1}
  #allocation0 [shape = 'u32[]', space=smem, size = 0x4, offset = 0x4, fixed_abs, tag = 'smem constant byte address 0x4 - core index']
  #allocation1 [shape = 'u32[144,128]{1,0:T(1,128)}', space=vmem, size = 0x12000, scoped, tag = 'internal scratch']
  #allocation2 [shape = 'f32[8,8,512]{2,1,0:T(8,128)}', space=vmem, size = 0x20000, scoped, tag = 'scratch operand']
  #allocation3 [shape = 'bf16[8,128]{1,0:T(8,128)(2,1)}', space=vmem, size = 0x800, scoped, tag = 'scratch operand']
  #allocation4 [shape = 'f32[8,128]{1,0:T(8,128)}', space=vmem, size = 0x1000, scoped, tag = 'scratch operand']
  %s0 = inlined_call_operand.hbm [shape: bf16[8,8,16], index: 0, kind: input, shape index: {}]
  %s1 = inlined_call_operand.hbm [shape: bf16[16,512], index: 1, kind: input, shape index: {}]
  %s2 = inlined_call_operand.hbm [shape: bf16[128,512], index: 2, kind: input, shape index: {}]
  %s3 = inlined_call_operand.vmem [shape: f32[1,512], index: 3, kind: input, shape index: {}]
  %s4 = inlined_call_operand.hbm [shape: f32[8,8,128], index: 4, kind: output, shape index: {}]
  %s5 = sld [smem:[#allocation0]]
  $region42: #{tpu_custom_call.1} parent=0
    _
  %s7 = ssub.s32 1, %s5
  %s8 = scalar_select 0, %s7, %s5
  $region1: #{tpu_custom_call.1} parent=0
    #allocation5 [shape = 'u8[16384]{0}', space=vmem, size = 0x4000, scoped, tag = 'input window, operand 0, single buffered']
    #allocation6 [shape = 's32[1]{0}', space=sflag, size = 0x4, scoped, tag = 'scoped memory for tpu_custom_call.1']
    #allocation7 [shape = 's32[1]{0}', space=sflag, size = 0x4, scoped, tag = 'scoped memory for tpu_custom_call.1']
    #allocation8 [shape = 'u8[16384]{0}', space=vmem, size = 0x4000, scoped, tag = 'input window, operand 1, single buffered']
    #allocation9 [shape = 's32[1]{0}', space=sflag, size = 0x4, scoped, tag = 'scoped memory for tpu_custom_call.1']
    #allocation10 [shape = 'u8[131072]{0}', space=vmem, size = 0x20000, scoped, tag = 'input window, operand 2, single buffered']
    #allocation11 [shape = 'u8[32768]{0}', space=vmem, size = 0x8000, scoped, tag = 'output window, operand 0, single buffered']
    %9 = vsyncpa [#allocation6], 0
    %10 = vsyncpa [#allocation9], 0
    %11 = vsyncpa [#allocation7], 0
    // Predicated region
    $region2: #{tpu_custom_call.1} parent=1 // pred_check
      _
    $region3: #{tpu_custom_call.1} parent=1 // pred_check_branch
      %13 = sbr.rel (0) target = $region5
    $region4: #{tpu_custom_call.1} parent=1 // pred_region
      %s15 = ssub.s32 512, 512
      %16 = vsyncadd [#allocation6], %s15
      %s17 = sshll.u32 [#allocation5], 4
      %s18 = int_to_ptr.vmem [resolvable:$true] %s17
      %23 = dma.hbm_to_vmem [thread:$0]  %s0, 512, %s18, [#allocation6], 64, 64, 4
    $region5: #{tpu_custom_call.1} parent=1 // pred_fallthru
      _
    // Predicated region
    $region6: #{tpu_custom_call.1} parent=1 // pred_check
      _
    $region7: #{tpu_custom_call.1} parent=1 // pred_check_branch
      %25 = sbr.rel (0) target = $region9
    $region8: #{tpu_custom_call.1} parent=1 // pred_region
      %s27 = ssub.s32 512, 512
      %28 = vsyncadd [#allocation9], %s27
      %s29 = sshll.u32 [#allocation8], 4
      %s30 = int_to_ptr.vmem [resolvable:$true] %s29
      %35 = dma.hbm_to_vmem [thread:$0]  %s1, 512, %s30, [#allocation9], 256, 256, 16
    $region9: #{tpu_custom_call.1} parent=1 // pred_fallthru
      _
    // Predicated region
    $region10: #{tpu_custom_call.1} parent=1 // pred_check
      _
    $region11: #{tpu_custom_call.1} parent=1 // pred_check_branch
      %37 = sbr.rel (0) target = $region13
    $region12: #{tpu_custom_call.1} parent=1 // pred_region
      %s39 = ssub.s32 4096, 4096
      %40 = vsyncadd [#allocation9], %s39
      %s41 = sshll.u32 [#allocation10], 4
      %s42 = int_to_ptr.vmem [resolvable:$true] %s41
      %47 = dma.hbm_to_vmem [thread:$0]  %s2, 4096, %s42, [#allocation9], 256, 256, 16
    $region13: #{tpu_custom_call.1} parent=1 // pred_fallthru
      _
    // Predicated region
    $region14: #{tpu_custom_call.1} parent=1 // pred_check
      _
    $region15: #{tpu_custom_call.1} parent=1 // pred_check_branch
      %49 = sbr.rel (0) target = $region17
    $region16: #{tpu_custom_call.1} parent=1 // pred_region
      _
    $region17: #{tpu_custom_call.1} parent=1 // pred_fallthru
      _
    // Predicated region
    $region18: #{tpu_custom_call.1} parent=1 // pred_check
      _
    $region19: #{tpu_custom_call.1} parent=1 // pred_check_branch
      %51 = sbr.rel (0) target = $region21
    $region20: #{tpu_custom_call.1} parent=1 // pred_region
      %52 = dma.done [#allocation6], 512
    $region21: #{tpu_custom_call.1} parent=1 // pred_fallthru
      _
    // Predicated region
    $region22: #{tpu_custom_call.1} parent=1 // pred_check
      _
    $region23: #{tpu_custom_call.1} parent=1 // pred_check_branch
      %54 = sbr.rel (0) target = $region25
    $region24: #{tpu_custom_call.1} parent=1 // pred_region
      %55 = dma.done [#allocation9], 512
    $region25: #{tpu_custom_call.1} parent=1 // pred_fallthru
      _
    // Predicated region
    $region26: #{tpu_custom_call.1} parent=1 // pred_check
      _
    $region27: #{tpu_custom_call.1} parent=1 // pred_check_branch
      %57 = sbr.rel (0) target = $region29
    $region28: #{tpu_custom_call.1} parent=1 // pred_region
      %58 = dma.done [#allocation9], 4096
    $region29: #{tpu_custom_call.1} parent=1 // pred_fallthru
      _
    %p60 = scmp.eq.s32.totalorder 0, 0
    // Predicated region
    $region30: #{tpu_custom_call.1} parent=1 // pred_check
      %p61 = pneg %p60
    $region31: #{tpu_custom_call.1} parent=1 // pred_check_branch
      %63 = sbr.rel (%p61) target = $region33
    $region32: #{tpu_custom_call.1} parent=1 // pred_region
      %64 = vst [vmem:[#allocation3] sm:$0xf] 0
      %65 = vst [vmem:[#allocation4] sm:$0xff] 0.0
    $region33: #{tpu_custom_call.1} parent=1 // pred_fallthru
      _
    %v66 = vld [vmem:[#allocation5] sm:$0xf]
    %v67 = vld [vmem:[#allocation5 + $0x4] sm:$0xf]
    %v68 = vld [vmem:[#allocation5 + $0x8] sm:$0xf]
    %v69 = vld [vmem:[#allocation5 + $0xc] sm:$0xf]
    %v70 = vld [vmem:[#allocation5 + $0x10] sm:$0xf]
    %v71 = vld [vmem:[#allocation5 + $0x14] sm:$0xf]
    %v72 = vld [vmem:[#allocation5 + $0x18] sm:$0xf]
    %v73 = vld [vmem:[#allocation5 + $0x1c] sm:$0xf]
    %v74 = vld [vmem:[#allocation8] sm:$0xff]
    %v75 = vld [vmem:[#allocation8 + $0x8] sm:$0xff]
    %v76 = vld [vmem:[#allocation8 + $0x10] sm:$0xff]
    %v77 = vld [vmem:[#allocation8 + $0x18] sm:$0xff]
    %v78 = vld [vmem:[%s3] sm:$0xf]
    %v80 = vlaneseq
    %v81 = vshrl.u32 %v80, 7
    %v82 = vsub.s32 0, %v81
    %v83 = vrot.slane %v78, %v82
    %v84 = vlaneseq
    %v85 = vshrl.u32 %v84, 7
    %v86 = vsub.s32 1, %v85
    %v87 = vrot.slane %v78, %v86
    %v88 = vlaneseq
    %v89 = vshrl.u32 %v88, 7
    %v90 = vsub.s32 2, %v89
    %v91 = vrot.slane %v78, %v90
    %v92 = vlaneseq
    %v93 = vshrl.u32 %v92, 7
    %v94 = vsub.s32 3, %v93
    %v95 = vrot.slane %v78, %v94
    %v108 = vunpack.c.l.b16 %v66
    %v109 = vunpack.c.l.b16 %v67
    %v110 = vunpack.c.l.b16 %v68
    %v111 = vunpack.c.l.b16 %v69
    %v112 = vunpack.c.l.b16 %v70
    %v113 = vunpack.c.l.b16 %v71
    %v114 = vunpack.c.l.b16 %v72
    %v115 = vunpack.c.l.b16 %v73
    %v116 = vpack.c.b16 %v109, %v108
    %v117 = vpack.c.b16 %v111, %v110
    %v118 = vpack.c.b16 %v113, %v112
    %v119 = vpack.c.b16 %v115, %v114
    %v124 = vunpack.c.l.b16 %v74
    %v125 = vunpack.c.h.b16 %v74
    %v126 = vunpack.c.l.b16 %v75
    %v127 = vunpack.c.h.b16 %v75
    %v128 = vunpack.c.l.b16 %v76
    %v129 = vunpack.c.h.b16 %v76
    %v130 = vunpack.c.l.b16 %v77
    %v131 = vunpack.c.h.b16 %v77
    %v132 = vpack.c.b16 %v128, %v124
    %v133 = vpack.c.b16 %v129, %v125
    %v134 = vpack.c.b16 %v130, %v126
    %v135 = vpack.c.b16 %v131, %v127
    %vm140 = vcmask 130048
    %v142 = vsel %vm140, %v116, 0
    %v145 = vsel %vm140, %v117, 0
    %v148 = vsel %vm140, %v118, 0
    %v151 = vsel %vm140, %v119, 0
    %153 = vmatprep.subr.bf16.mxu0 %v133
    %154 = vmatpush1.bf16.msra.mxu0 %v132
    %155 = vmatprep.subr.bf16.mxu0 0
    %156 = vmatpush1.bf16.msra.mxu0 0
    %157 = vmatprep.subr.bf16.mxu0 0
    %158 = vmatpush1.bf16.msra.mxu0 0
    %159 = vmatprep.subr.bf16.mxu0 0
    %160 = vmatpush1.bf16.msra.mxu0 0
    %161 = vmatprep.subr.bf16.mxu0 0
    %162 = vmatpush1.bf16.msra.mxu0 0
    %163 = vmatprep.subr.bf16.mxu0 0
    %164 = vmatpush1.bf16.msra.mxu0 0
    %165 = vmatprep.subr.bf16.mxu0 0
    %166 = vmatpush1.bf16.msra.mxu0 0
    %167 = vmatprep.subr.bf16.mxu0 0
    %168 = vmatpush1.bf16.msra.mxu0 0
    %169 = vmatprep.subr.bf16.mxu0 0
    %170 = vmatpush1.bf16.msra.mxu0 0
    %171 = vmatprep.subr.bf16.mxu0 0
    %172 = vmatpush1.bf16.msra.mxu0 0
    %173 = vmatprep.subr.bf16.mxu0 0
    %174 = vmatpush1.bf16.msra.mxu0 0
    %175 = vmatprep.subr.bf16.mxu0 0
    %176 = vmatpush1.bf16.msra.mxu0 0
    %177 = vmatprep.subr.bf16.mxu0 0
    %178 = vmatpush1.bf16.msra.mxu0 0
    %179 = vmatprep.subr.bf16.mxu0 0
    %180 = vmatpush1.bf16.msra.mxu0 0
    %181 = vmatprep.subr.bf16.mxu0 0
    %182 = vmatpush1.bf16.msra.mxu0 0
    %183 = vmatprep.subr.bf16.mxu0 0
    %184 = vmatpush1.bf16.msra.mxu0 0
    %185 = vmatprep.mubr.bf16.mxu0 0
    %186 = vmatmul.mubr.bf16.gmra.mrb[0].mxu0 %v142
    %v187 = vpop.f32.mrb[0].mxu0
    %v188 = vadd.f32 %v83, %v187
    %v189 = vpop.f32.mrb[0].mxu0
    %v190 = vadd.f32 %v87, %v189
    %v191 = vpop.f32.mrb[0].mxu0
    %v192 = vadd.f32 %v83, %v191
    %v193 = vpop.f32.mrb[0].mxu0
    %v194 = vadd.f32 %v87, %v193
    %195 = vmatprep.mubr.bf16.mxu0 0
    %196 = vmatmul.mubr.bf16.gmra.mrb[0].mxu0 %v145
    %v197 = vpop.f32.mrb[0].mxu0
    %v198 = vadd.f32 %v83, %v197
    %v199 = vpop.f32.mrb[0].mxu0
    %v200 = vadd.f32 %v87, %v199
    %v201 = vpop.f32.mrb[0].mxu0
    %v202 = vadd.f32 %v83, %v201
    %v203 = vpop.f32.mrb[0].mxu0
    %v204 = vadd.f32 %v87, %v203
    %205 = vmatprep.mubr.bf16.mxu0 0
    %206 = vmatmul.mubr.bf16.gmra.mrb[0].mxu0 %v148
    %v207 = vpop.f32.mrb[0].mxu0
    %v208 = vadd.f32 %v83, %v207
    %v209 = vpop.f32.mrb[0].mxu0
    %v210 = vadd.f32 %v87, %v209
    %v211 = vpop.f32.mrb[0].mxu0
    %v212 = vadd.f32 %v83, %v211
    %v213 = vpop.f32.mrb[0].mxu0
    %v214 = vadd.f32 %v87, %v213
    %215 = vmatprep.mubr.bf16.mxu0 0
    %216 = vmatmul.mubr.bf16.gmra.mrb[0].mxu0 %v151
    %v217 = vpop.f32.mrb[0].mxu0
    %v218 = vadd.f32 %v83, %v217
    %v219 = vpop.f32.mrb[0].mxu0
    %v220 = vadd.f32 %v87, %v219
    %v221 = vpop.f32.mrb[0].mxu0
    %v222 = vadd.f32 %v83, %v221
    %v223 = vpop.f32.mrb[0].mxu0
    %v224 = vadd.f32 %v87, %v223
    %225 = vdwg.mxu0
    %226 = vmatprep.subr.bf16.mxu0 %v135
    %227 = vmatpush1.bf16.msra.mxu0 %v134
    %228 = vmatprep.subr.bf16.mxu0 0
    %229 = vmatpush1.bf16.msra.mxu0 0
    %230 = vmatprep.subr.bf16.mxu0 0
    %231 = vmatpush1.bf16.msra.mxu0 0
    %232 = vmatprep.subr.bf16.mxu0 0
    %233 = vmatpush1.bf16.msra.mxu0 0
    %234 = vmatprep.subr.bf16.mxu0 0
    %235 = vmatpush1.bf16.msra.mxu0 0
    %236 = vmatprep.subr.bf16.mxu0 0
    %237 = vmatpush1.bf16.msra.mxu0 0
    %238 = vmatprep.subr.bf16.mxu0 0
    %239 = vmatpush1.bf16.msra.mxu0 0
    %240 = vmatprep.subr.bf16.mxu0 0
    %241 = vmatpush1.bf16.msra.mxu0 0
    %242 = vmatprep.subr.bf16.mxu0 0
    %243 = vmatpush1.bf16.msra.mxu0 0
    %244 = vmatprep.subr.bf16.mxu0 0
    %245 = vmatpush1.bf16.msra.mxu0 0
    %246 = vmatprep.subr.bf16.mxu0 0
    %247 = vmatpush1.bf16.msra.mxu0 0
    %248 = vmatprep.subr.bf16.mxu0 0
    %249 = vmatpush1.bf16.msra.mxu0 0
    %250 = vmatprep.subr.bf16.mxu0 0
    %251 = vmatpush1.bf16.msra.mxu0 0
    %252 = vmatprep.subr.bf16.mxu0 0
    %253 = vmatpush1.bf16.msra.mxu0 0
    %254 = vmatprep.subr.bf16.mxu0 0
    %255 = vmatpush1.bf16.msra.mxu0 0
    %256 = vmatprep.subr.bf16.mxu0 0
    %257 = vmatpush1.bf16.msra.mxu0 0
    %258 = vmatprep.mubr.bf16.mxu0 0
    %259 = vmatmul.mubr.bf16.gmra.mrb[0].mxu0 %v142
    %v260 = vpop.f32.mrb[0].mxu0
    %v261 = vadd.f32 %v91, %v260
    %v262 = vpop.f32.mrb[0].mxu0
    %v263 = vadd.f32 %v95, %v262
    %v264 = vpop.f32.mrb[0].mxu0
    %v265 = vadd.f32 %v91, %v264
    %v266 = vpop.f32.mrb[0].mxu0
    %v267 = vadd.f32 %v95, %v266
    %268 = vmatprep.mubr.bf16.mxu0 0
    %269 = vmatmul.mubr.bf16.gmra.mrb[0].mxu0 %v145
    %v270 = vpop.f32.mrb[0].mxu0
    %v271 = vadd.f32 %v91, %v270
    %v272 = vpop.f32.mrb[0].mxu0
    %v273 = vadd.f32 %v95, %v272
    %v274 = vpop.f32.mrb[0].mxu0
    %v275 = vadd.f32 %v91, %v274
    %v276 = vpop.f32.mrb[0].mxu0
    %v277 = vadd.f32 %v95, %v276
    %278 = vmatprep.mubr.bf16.mxu0 0
    %279 = vmatmul.mubr.bf16.gmra.mrb[0].mxu0 %v148
    %v280 = vpop.f32.mrb[0].mxu0
    %v281 = vadd.f32 %v91, %v280
    %v282 = vpop.f32.mrb[0].mxu0
    %v283 = vadd.f32 %v95, %v282
    %v284 = vpop.f32.mrb[0].mxu0
    %v285 = vadd.f32 %v91, %v284
    %v286 = vpop.f32.mrb[0].mxu0
    %v287 = vadd.f32 %v95, %v286
    %288 = vmatprep.mubr.bf16.mxu0 0
    %289 = vmatmul.mubr.bf16.gmra.mrb[0].mxu0 %v151
    %v290 = vpop.f32.mrb[0].mxu0
    %v291 = vadd.f32 %v91, %v290
    %v292 = vpop.f32.mrb[0].mxu0
    %v293 = vadd.f32 %v95, %v292
    %v294 = vpop.f32.mrb[0].mxu0
    %v295 = vadd.f32 %v91, %v294
    %v296 = vpop.f32.mrb[0].mxu0
    %v297 = vadd.f32 %v95, %v296
    %298 = vdwg.mxu0
    %299 = vst [vmem:[#allocation2] sm:$0xff] %v188
    %300 = vst [vmem:[#allocation2 + $0x8] sm:$0xff] %v190
    %301 = vst [vmem:[#allocation2 + $0x10] sm:$0xff] %v261
    %302 = vst [vmem:[#allocation2 + $0x18] sm:$0xff] %v263
    %303 = vst [vmem:[#allocation2 + $0x20] sm:$0xff] %v192
    %304 = vst [vmem:[#allocation2 + $0x28] sm:$0xff] %v194
    %305 = vst [vmem:[#allocation2 + $0x30] sm:$0xff] %v265
    %306 = vst [vmem:[#allocation2 + $0x38] sm:$0xff] %v267
    %307 = vst [vmem:[#allocation2 + $0x40] sm:$0xff] %v198
    %308 = vst [vmem:[#allocation2 + $0x48] sm:$0xff] %v200
    %309 = vst [vmem:[#allocation2 + $0x50] sm:$0xff] %v271
    %310 = vst [vmem:[#allocation2 + $0x58] sm:$0xff] %v273
    %311 = vst [vmem:[#allocation2 + $0x60] sm:$0xff] %v202
    %312 = vst [vmem:[#allocation2 + $0x68] sm:$0xff] %v204
    %313 = vst [vmem:[#allocation2 + $0x70] sm:$0xff] %v275
    %314 = vst [vmem:[#allocation2 + $0x78] sm:$0xff] %v277
    %315 = vst [vmem:[#allocation2 + $0x80] sm:$0xff] %v208
    %316 = vst [vmem:[#allocation2 + $0x88] sm:$0xff] %v210
    %317 = vst [vmem:[#allocation2 + $0x90] sm:$0xff] %v281
    %318 = vst [vmem:[#allocation2 + $0x98] sm:$0xff] %v283
    %319 = vst [vmem:[#allocation2 + $0xa0] sm:$0xff] %v212
    %320 = vst [vmem:[#allocation2 + $0xa8] sm:$0xff] %v214
    %321 = vst [vmem:[#allocation2 + $0xb0] sm:$0xff] %v285
    %322 = vst [vmem:[#allocation2 + $0xb8] sm:$0xff] %v287
    %323 = vst [vmem:[#allocation2 + $0xc0] sm:$0xff] %v218
    %324 = vst [vmem:[#allocation2 + $0xc8] sm:$0xff] %v220
    %325 = vst [vmem:[#allocation2 + $0xd0] sm:$0xff] %v291
    %326 = vst [vmem:[#allocation2 + $0xd8] sm:$0xff] %v293
    %327 = vst [vmem:[#allocation2 + $0xe0] sm:$0xff] %v222
    %328 = vst [vmem:[#allocation2 + $0xe8] sm:$0xff] %v224
    %329 = vst [vmem:[#allocation2 + $0xf0] sm:$0xff] %v295
    %330 = vst [vmem:[#allocation2 + $0xf8] sm:$0xff] %v297
    %v331 = vld [vmem:[#allocation10] sm:$0xff]
    %v332 = vld [vmem:[#allocation10 + $0x8] sm:$0xff]
    %v333 = vld [vmem:[#allocation10 + $0x10] sm:$0xff]
    %v334 = vld [vmem:[#allocation10 + $0x18] sm:$0xff]
    %v335 = vld [vmem:[#allocation10 + $0x20] sm:$0xff]
    %v336 = vld [vmem:[#allocation10 + $0x28] sm:$0xff]
    %v337 = vld [vmem:[#allocation10 + $0x30] sm:$0xff]
    %v338 = vld [vmem:[#allocation10 + $0x38] sm:$0xff]
    %v339 = vld [vmem:[#allocation10 + $0x40] sm:$0xff]
    %v340 = vld [vmem:[#allocation10 + $0x48] sm:$0xff]
    %v341 = vld [vmem:[#allocation10 + $0x50] sm:$0xff]
    %v342 = vld [vmem:[#allocation10 + $0x58] sm:$0xff]
    %v343 = vld [vmem:[#allocation10 + $0x60] sm:$0xff]
    %v344 = vld [vmem:[#allocation10 + $0x68] sm:$0xff]
    %v345 = vld [vmem:[#allocation10 + $0x70] sm:$0xff]
    %v346 = vld [vmem:[#allocation10 + $0x78] sm:$0xff]
    %v347 = vld [vmem:[#allocation10 + $0x80] sm:$0xff]
    %v348 = vld [vmem:[#allocation10 + $0x88] sm:$0xff]
    %v349 = vld [vmem:[#allocation10 + $0x90] sm:$0xff]
    %v350 = vld [vmem:[#allocation10 + $0x98] sm:$0xff]
    %v351 = vld [vmem:[#allocation10 + $0xa0] sm:$0xff]
    %v352 = vld [vmem:[#allocation10 + $0xa8] sm:$0xff]
    %v353 = vld [vmem:[#allocation10 + $0xb0] sm:$0xff]
    %v354 = vld [vmem:[#allocation10 + $0xb8] sm:$0xff]
    %v355 = vld [vmem:[#allocation10 + $0xc0] sm:$0xff]
    %v356 = vld [vmem:[#allocation10 + $0xc8] sm:$0xff]
    %v357 = vld [vmem:[#allocation10 + $0xd0] sm:$0xff]
    %v358 = vld [vmem:[#allocation10 + $0xd8] sm:$0xff]
    %v359 = vld [vmem:[#allocation10 + $0xe0] sm:$0xff]
    %v360 = vld [vmem:[#allocation10 + $0xe8] sm:$0xff]
    %v361 = vld [vmem:[#allocation10 + $0xf0] sm:$0xff]
    %v362 = vld [vmem:[#allocation10 + $0xf8] sm:$0xff]
    %v363 = vld [vmem:[#allocation3] sm:$0xf]
    %v364 = vld [vmem:[#allocation4] sm:$0xff]
    %v365 = vld [vmem:[#allocation2] sm:$0xff]
    %v366 = vld [vmem:[#allocation2 + $0x8] sm:$0xff]
    %v367 = vld [vmem:[#allocation2 + $0x10] sm:$0xff]
    %v368 = vld [vmem:[#allocation2 + $0x18] sm:$0xff]
    %v401 = vunpack.c.l.b16 %v331
    %v402 = vunpack.c.h.b16 %v331
    %v403 = vunpack.c.l.b16 %v332
    %v404 = vunpack.c.h.b16 %v332
    %v405 = vunpack.c.l.b16 %v333
    %v406 = vunpack.c.h.b16 %v333
    %v407 = vunpack.c.l.b16 %v334
    %v408 = vunpack.c.h.b16 %v334
    %v409 = vunpack.c.l.b16 %v335
    %v410 = vunpack.c.h.b16 %v335
    %v411 = vunpack.c.l.b16 %v336
    %v412 = vunpack.c.h.b16 %v336
    %v413 = vunpack.c.l.b16 %v337
    %v414 = vunpack.c.h.b16 %v337
    %v415 = vunpack.c.l.b16 %v338
    %v416 = vunpack.c.h.b16 %v338
    %v417 = vunpack.c.l.b16 %v339
    %v418 = vunpack.c.h.b16 %v339
    %v419 = vunpack.c.l.b16 %v340
    %v420 = vunpack.c.h.b16 %v340
    %v421 = vunpack.c.l.b16 %v341
    %v422 = vunpack.c.h.b16 %v341
    %v423 = vunpack.c.l.b16 %v342
    %v424 = vunpack.c.h.b16 %v342
    %v425 = vunpack.c.l.b16 %v343
    %v426 = vunpack.c.h.b16 %v343
    %v427 = vunpack.c.l.b16 %v344
    %v428 = vunpack.c.h.b16 %v344
    %v429 = vunpack.c.l.b16 %v345
    %v430 = vunpack.c.h.b16 %v345
    %v431 = vunpack.c.l.b16 %v346
    %v432 = vunpack.c.h.b16 %v346
    %v433 = vunpack.c.l.b16 %v347
    %v434 = vunpack.c.h.b16 %v347
    %v435 = vunpack.c.l.b16 %v348
    %v436 = vunpack.c.h.b16 %v348
    %v437 = vunpack.c.l.b16 %v349
    %v438 = vunpack.c.h.b16 %v349
    %v439 = vunpack.c.l.b16 %v350
    %v440 = vunpack.c.h.b16 %v350
    %v441 = vunpack.c.l.b16 %v351
    %v442 = vunpack.c.h.b16 %v351
    %v443 = vunpack.c.l.b16 %v352
    %v444 = vunpack.c.h.b16 %v352
    %v445 = vunpack.c.l.b16 %v353
    %v446 = vunpack.c.h.b16 %v353
    %v447 = vunpack.c.l.b16 %v354
    %v448 = vunpack.c.h.b16 %v354
    %v449 = vunpack.c.l.b16 %v355
    %v450 = vunpack.c.h.b16 %v355
    %v451 = vunpack.c.l.b16 %v356
    %v452 = vunpack.c.h.b16 %v356
    %v453 = vunpack.c.l.b16 %v357
    %v454 = vunpack.c.h.b16 %v357
    %v455 = vunpack.c.l.b16 %v358
    %v456 = vunpack.c.h.b16 %v358
    %v457 = vunpack.c.l.b16 %v359
    %v458 = vunpack.c.h.b16 %v359
    %v459 = vunpack.c.l.b16 %v360
    %v460 = vunpack.c.h.b16 %v360
    %v461 = vunpack.c.l.b16 %v361
    %v462 = vunpack.c.h.b16 %v361
    %v463 = vunpack.c.l.b16 %v362
    %v464 = vunpack.c.h.b16 %v362
    %v465 = vpack.c.b16 %v405, %v401
    %v466 = vpack.c.b16 %v406, %v402
    %v467 = vpack.c.b16 %v407, %v403
    %v468 = vpack.c.b16 %v408, %v404
    %v469 = vpack.c.b16 %v413, %v409
    %v470 = vpack.c.b16 %v414, %v410
    %v471 = vpack.c.b16 %v415, %v411
    %v472 = vpack.c.b16 %v416, %v412
    %v473 = vpack.c.b16 %v421, %v417
    %v474 = vpack.c.b16 %v422, %v418
    %v475 = vpack.c.b16 %v423, %v419
    %v476 = vpack.c.b16 %v424, %v420
    %v477 = vpack.c.b16 %v429, %v425
    %v478 = vpack.c.b16 %v430, %v426
    %v479 = vpack.c.b16 %v431, %v427
    %v480 = vpack.c.b16 %v432, %v428
    %v481 = vpack.c.b16 %v437, %v433
    %v482 = vpack.c.b16 %v438, %v434
    %v483 = vpack.c.b16 %v439, %v435
    %v484 = vpack.c.b16 %v440, %v436
    %v485 = vpack.c.b16 %v445, %v441
    %v486 = vpack.c.b16 %v446, %v442
    %v487 = vpack.c.b16 %v447, %v443
    %v488 = vpack.c.b16 %v448, %v444
    %v489 = vpack.c.b16 %v453, %v449
    %v490 = vpack.c.b16 %v454, %v450
    %v491 = vpack.c.b16 %v455, %v451
    %v492 = vpack.c.b16 %v456, %v452
    %v493 = vpack.c.b16 %v461, %v457
    %v494 = vpack.c.b16 %v462, %v458
    %v495 = vpack.c.b16 %v463, %v459
    %v496 = vpack.c.b16 %v464, %v460
    %529 = vmatprep.subr.bf16.mxu0 %v466
    %530 = vmatpush1.bf16.msra.mxu0 %v465
    %531 = vmatprep.subr.bf16.mxu0 %v470
    %532 = vmatpush1.bf16.msra.mxu0 %v469
    %533 = vmatprep.subr.bf16.mxu0 %v474
    %534 = vmatpush1.bf16.msra.mxu0 %v473
    %535 = vmatprep.subr.bf16.mxu0 %v478
    %536 = vmatpush1.bf16.msra.mxu0 %v477
    %537 = vmatprep.subr.bf16.mxu0 %v482
    %538 = vmatpush1.bf16.msra.mxu0 %v481
    %539 = vmatprep.subr.bf16.mxu0 %v486
    %540 = vmatpush1.bf16.msra.mxu0 %v485
    %541 = vmatprep.subr.bf16.mxu0 %v490
    %542 = vmatpush1.bf16.msra.mxu0 %v489
    %543 = vmatprep.subr.bf16.mxu0 %v494
    %544 = vmatpush1.bf16.msra.mxu0 %v493
    %545 = vmatprep.subr.bf16.mxu0 0
    %546 = vmatpush1.bf16.msra.mxu0 0
    %547 = vmatprep.subr.bf16.mxu0 0
    %548 = vmatpush1.bf16.msra.mxu0 0
    %549 = vmatprep.subr.bf16.mxu0 0
    %550 = vmatpush1.bf16.msra.mxu0 0
    %551 = vmatprep.subr.bf16.mxu0 0
    %552 = vmatpush1.bf16.msra.mxu0 0
    %553 = vmatprep.subr.bf16.mxu0 0
    %554 = vmatpush1.bf16.msra.mxu0 0
    %555 = vmatprep.subr.bf16.mxu0 0
    %556 = vmatpush1.bf16.msra.mxu0 0
    %557 = vmatprep.subr.bf16.mxu0 0
    %558 = vmatpush1.bf16.msra.mxu0 0
    %559 = vmatprep.subr.bf16.mxu0 0
    %560 = vmatpush1.bf16.msra.mxu0 0
    %561 = vmatprep.mubr.bf16.mxu0 0
    %562 = vmatmul.mubr.bf16.gmra.mrb[0].mxu0 %v363
    %v563 = vpop.f32.mrb[0].mxu0
    %v564 = vadd.f32 %v365, %v563
    %v565 = vpop.f32.mrb[0].mxu0
    %v566 = vadd.f32 %v366, %v565
    %v567 = vpop.f32.mrb[0].mxu0
    %v568 = vpop.f32.mrb[0].mxu0
    %569 = vdwg.mxu0
    %570 = vmatprep.subr.bf16.mxu0 %v468
    %571 = vmatpush1.bf16.msra.mxu0 %v467
    %572 = vmatprep.subr.bf16.mxu0 %v472
    %573 = vmatpush1.bf16.msra.mxu0 %v471
    %574 = vmatprep.subr.bf16.mxu0 %v476
    %575 = vmatpush1.bf16.msra.mxu0 %v475
    %576 = vmatprep.subr.bf16.mxu0 %v480
    %577 = vmatpush1.bf16.msra.mxu0 %v479
    %578 = vmatprep.subr.bf16.mxu0 %v484
    %579 = vmatpush1.bf16.msra.mxu0 %v483
    %580 = vmatprep.subr.bf16.mxu0 %v488
    %581 = vmatpush1.bf16.msra.mxu0 %v487
    %582 = vmatprep.subr.bf16.mxu0 %v492
    %583 = vmatpush1.bf16.msra.mxu0 %v491
    %584 = vmatprep.subr.bf16.mxu0 %v496
    %585 = vmatpush1.bf16.msra.mxu0 %v495
    %586 = vmatprep.subr.bf16.mxu0 0
    %587 = vmatpush1.bf16.msra.mxu0 0
    %588 = vmatprep.subr.bf16.mxu0 0
    %589 = vmatpush1.bf16.msra.mxu0 0
    %590 = vmatprep.subr.bf16.mxu0 0
    %591 = vmatpush1.bf16.msra.mxu0 0
    %592 = vmatprep.subr.bf16.mxu0 0
    %593 = vmatpush1.bf16.msra.mxu0 0
    %594 = vmatprep.subr.bf16.mxu0 0
    %595 = vmatpush1.bf16.msra.mxu0 0
    %596 = vmatprep.subr.bf16.mxu0 0
    %597 = vmatpush1.bf16.msra.mxu0 0
    %598 = vmatprep.subr.bf16.mxu0 0
    %599 = vmatpush1.bf16.msra.mxu0 0
    %600 = vmatprep.subr.bf16.mxu0 0
    %601 = vmatpush1.bf16.msra.mxu0 0
    %602 = vmatprep.mubr.bf16.mxu0 0
    %603 = vmatmul.mubr.bf16.gmra.mrb[0].mxu0 %v363
    %v604 = vpop.f32.mrb[0].mxu0
    %v605 = vadd.f32 %v367, %v604
    %v606 = vpop.f32.mrb[0].mxu0
    %v607 = vadd.f32 %v368, %v606
    %v608 = vpop.f32.mrb[0].mxu0
    %v609 = vpop.f32.mrb[0].mxu0
    %610 = vdwg.mxu0
    %v611 = vmul.f32 %v564, 0.5
    %v612 = vtanh.pop %v611
    %v613 = vmul.f32 %v612, 0.5
    %v614 = vadd.f32 %v613, 0.5
    %v615 = vmul.f32 %v566, 0.5
    %v616 = vtanh.pop %v615
    %v617 = vmul.f32 %v616, 0.5
    %v618 = vadd.f32 %v617, 0.5
    %v619 = vtanh.pop %v605
    %v620 = vmul.f32 %v607, 0.5
    %v621 = vtanh.pop %v620
    %v622 = vmul.f32 %v621, 0.5
    %v623 = vadd.f32 %v622, 0.5
    %v624 = vmul.f32 %v614, %v364
    %v625 = vmul.f32 %v618, %v619
    %v626 = vadd.f32 %v624, %v625
    %v627 = vtanh.pop %v626
    %v628 = vmul.f32 %v623, %v627
    %629 = vst [vmem:[#allocation11] sm:$0xff] %v628
    %v630 = vpack.c.bf16 %v628, %v628
    %s631 = scalar_lea.vmem [#allocation2], 32
    %v632 = vld [vmem:[%s631] sm:$0xff]
    %v633 = vld [vmem:[%s631 + $0x8] sm:$0xff]
    %v634 = vld [vmem:[%s631 + $0x10] sm:$0xff]
    %v635 = vld [vmem:[%s631 + $0x18] sm:$0xff]
    %636 = vmatprep.subr.bf16.mxu0 %v466
    %637 = vmatpush1.bf16.msra.mxu0 %v465
    %638 = vmatprep.subr.bf16.mxu0 %v470
    %639 = vmatpush1.bf16.msra.mxu0 %v469
    %640 = vmatprep.subr.bf16.mxu0 %v474
    %641 = vmatpush1.bf16.msra.mxu0 %v473
    %642 = vmatprep.subr.bf16.mxu0 %v478
    %643 = vmatpush1.bf16.msra.mxu0 %v477
    %644 = vmatprep.subr.bf16.mxu0 %v482
    %645 = vmatpush1.bf16.msra.mxu0 %v481
    %646 = vmatprep.subr.bf16.mxu0 %v486
    %647 = vmatpush1.bf16.msra.mxu0 %v485
    %648 = vmatprep.subr.bf16.mxu0 %v490
    %649 = vmatpush1.bf16.msra.mxu0 %v489
    %650 = vmatprep.subr.bf16.mxu0 %v494
    %651 = vmatpush1.bf16.msra.mxu0 %v493
    %652 = vmatprep.subr.bf16.mxu0 0
    %653 = vmatpush1.bf16.msra.mxu0 0
    %654 = vmatprep.subr.bf16.mxu0 0
    %655 = vmatpush1.bf16.msra.mxu0 0
    %656 = vmatprep.subr.bf16.mxu0 0
    %657 = vmatpush1.bf16.msra.mxu0 0
    %658 = vmatprep.subr.bf16.mxu0 0
    %659 = vmatpush1.bf16.msra.mxu0 0
    %660 = vmatprep.subr.bf16.mxu0 0
    %661 = vmatpush1.bf16.msra.mxu0 0
    %662 = vmatprep.subr.bf16.mxu0 0
    %663 = vmatpush1.bf16.msra.mxu0 0
    %664 = vmatprep.subr.bf16.mxu0 0
    %665 = vmatpush1.bf16.msra.mxu0 0
    %666 = vmatprep.subr.bf16.mxu0 0
    %667 = vmatpush1.bf16.msra.mxu0 0
    %668 = vmatprep.mubr.bf16.mxu0 0
    %669 = vmatmul.mubr.bf16.gmra.mrb[0].mxu0 %v630
    %v670 = vpop.f32.mrb[0].mxu0
    %v671 = vadd.f32 %v632, %v670
    %v672 = vpop.f32.mrb[0].mxu0
    %v673 = vadd.f32 %v633, %v672
    %v674 = vpop.f32.mrb[0].mxu0
    %v675 = vpop.f32.mrb[0].mxu0
    %676 = vdwg.mxu0
    %677 = vmatprep.subr.bf16.mxu0 %v468
    %678 = vmatpush1.bf16.msra.mxu0 %v467
    %679 = vmatprep.subr.bf16.mxu0 %v472
    %680 = vmatpush1.bf16.msra.mxu0 %v471
    %681 = vmatprep.subr.bf16.mxu0 %v476
    %682 = vmatpush1.bf16.msra.mxu0 %v475
    %683 = vmatprep.subr.bf16.mxu0 %v480
    %684 = vmatpush1.bf16.msra.mxu0 %v479
    %685 = vmatprep.subr.bf16.mxu0 %v484
    %686 = vmatpush1.bf16.msra.mxu0 %v483
    %687 = vmatprep.subr.bf16.mxu0 %v488
    %688 = vmatpush1.bf16.msra.mxu0 %v487
    %689 = vmatprep.subr.bf16.mxu0 %v492
    %690 = vmatpush1.bf16.msra.mxu0 %v491
    %691 = vmatprep.subr.bf16.mxu0 %v496
    %692 = vmatpush1.bf16.msra.mxu0 %v495
    %693 = vmatprep.subr.bf16.mxu0 0
    %694 = vmatpush1.bf16.msra.mxu0 0
    %695 = vmatprep.subr.bf16.mxu0 0
    %696 = vmatpush1.bf16.msra.mxu0 0
    %697 = vmatprep.subr.bf16.mxu0 0
    %698 = vmatpush1.bf16.msra.mxu0 0
    %699 = vmatprep.subr.bf16.mxu0 0
    %700 = vmatpush1.bf16.msra.mxu0 0
    %701 = vmatprep.subr.bf16.mxu0 0
    %702 = vmatpush1.bf16.msra.mxu0 0
    %703 = vmatprep.subr.bf16.mxu0 0
    %704 = vmatpush1.bf16.msra.mxu0 0
    %705 = vmatprep.subr.bf16.mxu0 0
    %706 = vmatpush1.bf16.msra.mxu0 0
    %707 = vmatprep.subr.bf16.mxu0 0
    %708 = vmatpush1.bf16.msra.mxu0 0
    %709 = vmatprep.mubr.bf16.mxu0 0
    %710 = vmatmul.mubr.bf16.gmra.mrb[0].mxu0 %v630
    %v711 = vpop.f32.mrb[0].mxu0
    %v712 = vadd.f32 %v634, %v711
    %v713 = vpop.f32.mrb[0].mxu0
    %v714 = vadd.f32 %v635, %v713
    %v715 = vpop.f32.mrb[0].mxu0
    %v716 = vpop.f32.mrb[0].mxu0
    %717 = vdwg.mxu0
    %v718 = vmul.f32 %v671, 0.5
    %v719 = vtanh.pop %v718
    %v720 = vmul.f32 %v719, 0.5
    %v721 = vadd.f32 %v720, 0.5
    %v722 = vmul.f32 %v673, 0.5
    %v723 = vtanh.pop %v722
    %v724 = vmul.f32 %v723, 0.5
    %v725 = vadd.f32 %v724, 0.5
    %v726 = vtanh.pop %v712
    %v727 = vmul.f32 %v714, 0.5
    %v728 = vtanh.pop %v727
    %v729 = vmul.f32 %v728, 0.5
    %v730 = vadd.f32 %v729, 0.5
    %v731 = vmul.f32 %v721, %v626
    %v732 = vmul.f32 %v725, %v726
    %v733 = vadd.f32 %v731, %v732
    %v734 = vtanh.pop %v733
    %v735 = vmul.f32 %v730, %v734
    %s736 = scalar_lea.vmem [#allocation11], 8
    %737 = vst [vmem:[%s736] sm:$0xff] %v735
    %v738 = vpack.c.bf16 %v735, %v735
    %s739 = scalar_lea.vmem [#allocation2], 64
    %v740 = vld [vmem:[%s739] sm:$0xff]
    %v741 = vld [vmem:[%s739 + $0x8] sm:$0xff]
    %v742 = vld [vmem:[%s739 + $0x10] sm:$0xff]
    %v743 = vld [vmem:[%s739 + $0x18] sm:$0xff]
    %744 = vmatprep.subr.bf16.mxu0 %v466
    %745 = vmatpush1.bf16.msra.mxu0 %v465
    %746 = vmatprep.subr.bf16.mxu0 %v470
    %747 = vmatpush1.bf16.msra.mxu0 %v469
    %748 = vmatprep.subr.bf16.mxu0 %v474
    %749 = vmatpush1.bf16.msra.mxu0 %v473
    %750 = vmatprep.subr.bf16.mxu0 %v478
    %751 = vmatpush1.bf16.msra.mxu0 %v477
    %752 = vmatprep.subr.bf16.mxu0 %v482
    %753 = vmatpush1.bf16.msra.mxu0 %v481
    %754 = vmatprep.subr.bf16.mxu0 %v486
    %755 = vmatpush1.bf16.msra.mxu0 %v485
    %756 = vmatprep.subr.bf16.mxu0 %v490
    %757 = vmatpush1.bf16.msra.mxu0 %v489
    %758 = vmatprep.subr.bf16.mxu0 %v494
    %759 = vmatpush1.bf16.msra.mxu0 %v493
    %760 = vmatprep.subr.bf16.mxu0 0
    %761 = vmatpush1.bf16.msra.mxu0 0
    %762 = vmatprep.subr.bf16.mxu0 0
    %763 = vmatpush1.bf16.msra.mxu0 0
    %764 = vmatprep.subr.bf16.mxu0 0
    %765 = vmatpush1.bf16.msra.mxu0 0
    %766 = vmatprep.subr.bf16.mxu0 0
    %767 = vmatpush1.bf16.msra.mxu0 0
    %768 = vmatprep.subr.bf16.mxu0 0
    %769 = vmatpush1.bf16.msra.mxu0 0
    %770 = vmatprep.subr.bf16.mxu0 0
    %771 = vmatpush1.bf16.msra.mxu0 0
    %772 = vmatprep.subr.bf16.mxu0 0
    %773 = vmatpush1.bf16.msra.mxu0 0
    %774 = vmatprep.subr.bf16.mxu0 0
    %775 = vmatpush1.bf16.msra.mxu0 0
    %776 = vmatprep.mubr.bf16.mxu0 0
    %777 = vmatmul.mubr.bf16.gmra.mrb[0].mxu0 %v738
    %v778 = vpop.f32.mrb[0].mxu0
    %v779 = vadd.f32 %v740, %v778
    %v780 = vpop.f32.mrb[0].mxu0
    %v781 = vadd.f32 %v741, %v780
    %v782 = vpop.f32.mrb[0].mxu0
    %v783 = vpop.f32.mrb[0].mxu0
    %784 = vdwg.mxu0
    %785 = vmatprep.subr.bf16.mxu0 %v468
    %786 = vmatpush1.bf16.msra.mxu0 %v467
    %787 = vmatprep.subr.bf16.mxu0 %v472
    %788 = vmatpush1.bf16.msra.mxu0 %v471
    %789 = vmatprep.subr.bf16.mxu0 %v476
    %790 = vmatpush1.bf16.msra.mxu0 %v475
    %791 = vmatprep.subr.bf16.mxu0 %v480
    %792 = vmatpush1.bf16.msra.mxu0 %v479
    %793 = vmatprep.subr.bf16.mxu0 %v484
    %794 = vmatpush1.bf16.msra.mxu0 %v483
    %795 = vmatprep.subr.bf16.mxu0 %v488
    %796 = vmatpush1.bf16.msra.mxu0 %v487
    %797 = vmatprep.subr.bf16.mxu0 %v492
    %798 = vmatpush1.bf16.msra.mxu0 %v491
    %799 = vmatprep.subr.bf16.mxu0 %v496
    %800 = vmatpush1.bf16.msra.mxu0 %v495
    %801 = vmatprep.subr.bf16.mxu0 0
    %802 = vmatpush1.bf16.msra.mxu0 0
    %803 = vmatprep.subr.bf16.mxu0 0
    %804 = vmatpush1.bf16.msra.mxu0 0
    %805 = vmatprep.subr.bf16.mxu0 0
    %806 = vmatpush1.bf16.msra.mxu0 0
    %807 = vmatprep.subr.bf16.mxu0 0
    %808 = vmatpush1.bf16.msra.mxu0 0
    %809 = vmatprep.subr.bf16.mxu0 0
    %810 = vmatpush1.bf16.msra.mxu0 0
    %811 = vmatprep.subr.bf16.mxu0 0
    %812 = vmatpush1.bf16.msra.mxu0 0
    %813 = vmatprep.subr.bf16.mxu0 0
    %814 = vmatpush1.bf16.msra.mxu0 0
    %815 = vmatprep.subr.bf16.mxu0 0
    %816 = vmatpush1.bf16.msra.mxu0 0
    %817 = vmatprep.mubr.bf16.mxu0 0
    %818 = vmatmul.mubr.bf16.gmra.mrb[0].mxu0 %v738
    %v819 = vpop.f32.mrb[0].mxu0
    %v820 = vadd.f32 %v742, %v819
    %v821 = vpop.f32.mrb[0].mxu0
    %v822 = vadd.f32 %v743, %v821
    %v823 = vpop.f32.mrb[0].mxu0
    %v824 = vpop.f32.mrb[0].mxu0
    %825 = vdwg.mxu0
    %v826 = vmul.f32 %v779, 0.5
    %v827 = vtanh.pop %v826
    %v828 = vmul.f32 %v827, 0.5
    %v829 = vadd.f32 %v828, 0.5
    %v830 = vmul.f32 %v781, 0.5
    %v831 = vtanh.pop %v830
    %v832 = vmul.f32 %v831, 0.5
    %v833 = vadd.f32 %v832, 0.5
    %v834 = vtanh.pop %v820
    %v835 = vmul.f32 %v822, 0.5
    %v836 = vtanh.pop %v835
    %v837 = vmul.f32 %v836, 0.5
    %v838 = vadd.f32 %v837, 0.5
    %v839 = vmul.f32 %v829, %v733
    %v840 = vmul.f32 %v833, %v834
    %v841 = vadd.f32 %v839, %v840
    %v842 = vtanh.pop %v841
    %v843 = vmul.f32 %v838, %v842
    %s844 = scalar_lea.vmem [#allocation11], 16
    %845 = vst [vmem:[%s844] sm:$0xff] %v843
    %v846 = vpack.c.bf16 %v843, %v843
    %s847 = scalar_lea.vmem [#allocation2], 96
    %v848 = vld [vmem:[%s847] sm:$0xff]
    %v849 = vld [vmem:[%s847 + $0x8] sm:$0xff]
    %v850 = vld [vmem:[%s847 + $0x10] sm:$0xff]
    %v851 = vld [vmem:[%s847 + $0x18] sm:$0xff]
    %852 = vmatprep.subr.bf16.mxu0 %v466
    %853 = vmatpush1.bf16.msra.mxu0 %v465
    %854 = vmatprep.subr.bf16.mxu0 %v470
    %855 = vmatpush1.bf16.msra.mxu0 %v469
    %856 = vmatprep.subr.bf16.mxu0 %v474
    %857 = vmatpush1.bf16.msra.mxu0 %v473
    %858 = vmatprep.subr.bf16.mxu0 %v478
    %859 = vmatpush1.bf16.msra.mxu0 %v477
    %860 = vmatprep.subr.bf16.mxu0 %v482
    %861 = vmatpush1.bf16.msra.mxu0 %v481
    %862 = vmatprep.subr.bf16.mxu0 %v486
    %863 = vmatpush1.bf16.msra.mxu0 %v485
    %864 = vmatprep.subr.bf16.mxu0 %v490
    %865 = vmatpush1.bf16.msra.mxu0 %v489
    %866 = vmatprep.subr.bf16.mxu0 %v494
    %867 = vmatpush1.bf16.msra.mxu0 %v493
    %868 = vmatprep.subr.bf16.mxu0 0
    %869 = vmatpush1.bf16.msra.mxu0 0
    %870 = vmatprep.subr.bf16.mxu0 0
    %871 = vmatpush1.bf16.msra.mxu0 0
    %872 = vmatprep.subr.bf16.mxu0 0
    %873 = vmatpush1.bf16.msra.mxu0 0
    %874 = vmatprep.subr.bf16.mxu0 0
    %875 = vmatpush1.bf16.msra.mxu0 0
    %876 = vmatprep.subr.bf16.mxu0 0
    %877 = vmatpush1.bf16.msra.mxu0 0
    %878 = vmatprep.subr.bf16.mxu0 0
    %879 = vmatpush1.bf16.msra.mxu0 0
    %880 = vmatprep.subr.bf16.mxu0 0
    %881 = vmatpush1.bf16.msra.mxu0 0
    %882 = vmatprep.subr.bf16.mxu0 0
    %883 = vmatpush1.bf16.msra.mxu0 0
    %884 = vmatprep.mubr.bf16.mxu0 0
    %885 = vmatmul.mubr.bf16.gmra.mrb[0].mxu0 %v846
    %v886 = vpop.f32.mrb[0].mxu0
    %v887 = vadd.f32 %v848, %v886
    %v888 = vpop.f32.mrb[0].mxu0
    %v889 = vadd.f32 %v849, %v888
    %v890 = vpop.f32.mrb[0].mxu0
    %v891 = vpop.f32.mrb[0].mxu0
    %892 = vdwg.mxu0
    %893 = vmatprep.subr.bf16.mxu0 %v468
    %894 = vmatpush1.bf16.msra.mxu0 %v467
    %895 = vmatprep.subr.bf16.mxu0 %v472
    %896 = vmatpush1.bf16.msra.mxu0 %v471
    %897 = vmatprep.subr.bf16.mxu0 %v476
    %898 = vmatpush1.bf16.msra.mxu0 %v475
    %899 = vmatprep.subr.bf16.mxu0 %v480
    %900 = vmatpush1.bf16.msra.mxu0 %v479
    %901 = vmatprep.subr.bf16.mxu0 %v484
    %902 = vmatpush1.bf16.msra.mxu0 %v483
    %903 = vmatprep.subr.bf16.mxu0 %v488
    %904 = vmatpush1.bf16.msra.mxu0 %v487
    %905 = vmatprep.subr.bf16.mxu0 %v492
    %906 = vmatpush1.bf16.msra.mxu0 %v491
    %907 = vmatprep.subr.bf16.mxu0 %v496
    %908 = vmatpush1.bf16.msra.mxu0 %v495
    %909 = vmatprep.subr.bf16.mxu0 0
    %910 = vmatpush1.bf16.msra.mxu0 0
    %911 = vmatprep.subr.bf16.mxu0 0
    %912 = vmatpush1.bf16.msra.mxu0 0
    %913 = vmatprep.subr.bf16.mxu0 0
    %914 = vmatpush1.bf16.msra.mxu0 0
    %915 = vmatprep.subr.bf16.mxu0 0
    %916 = vmatpush1.bf16.msra.mxu0 0
    %917 = vmatprep.subr.bf16.mxu0 0
    %918 = vmatpush1.bf16.msra.mxu0 0
    %919 = vmatprep.subr.bf16.mxu0 0
    %920 = vmatpush1.bf16.msra.mxu0 0
    %921 = vmatprep.subr.bf16.mxu0 0
    %922 = vmatpush1.bf16.msra.mxu0 0
    %923 = vmatprep.subr.bf16.mxu0 0
    %924 = vmatpush1.bf16.msra.mxu0 0
    %925 = vmatprep.mubr.bf16.mxu0 0
    %926 = vmatmul.mubr.bf16.gmra.mrb[0].mxu0 %v846
    %v927 = vpop.f32.mrb[0].mxu0
    %v928 = vadd.f32 %v850, %v927
    %v929 = vpop.f32.mrb[0].mxu0
    %v930 = vadd.f32 %v851, %v929
    %v931 = vpop.f32.mrb[0].mxu0
    %v932 = vpop.f32.mrb[0].mxu0
    %933 = vdwg.mxu0
    %v934 = vmul.f32 %v887, 0.5
    %v935 = vtanh.pop %v934
    %v936 = vmul.f32 %v935, 0.5
    %v937 = vadd.f32 %v936, 0.5
    %v938 = vmul.f32 %v889, 0.5
    %v939 = vtanh.pop %v938
    %v940 = vmul.f32 %v939, 0.5
    %v941 = vadd.f32 %v940, 0.5
    %v942 = vtanh.pop %v928
    %v943 = vmul.f32 %v930, 0.5
    %v944 = vtanh.pop %v943
    %v945 = vmul.f32 %v944, 0.5
    %v946 = vadd.f32 %v945, 0.5
    %v947 = vmul.f32 %v937, %v841
    %v948 = vmul.f32 %v941, %v942
    %v949 = vadd.f32 %v947, %v948
    %v950 = vtanh.pop %v949
    %v951 = vmul.f32 %v946, %v950
    %s952 = scalar_lea.vmem [#allocation11], 24
    %953 = vst [vmem:[%s952] sm:$0xff] %v951
    %v954 = vpack.c.bf16 %v951, %v951
    %s955 = scalar_lea.vmem [#allocation2], 128
    %v956 = vld [vmem:[%s955] sm:$0xff]
    %v957 = vld [vmem:[%s955 + $0x8] sm:$0xff]
    %v958 = vld [vmem:[%s955 + $0x10] sm:$0xff]
    %v959 = vld [vmem:[%s955 + $0x18] sm:$0xff]
    %960 = vmatprep.subr.bf16.mxu0 %v466
    %961 = vmatpush1.bf16.msra.mxu0 %v465
    %962 = vmatprep.subr.bf16.mxu0 %v470
    %963 = vmatpush1.bf16.msra.mxu0 %v469
    %964 = vmatprep.subr.bf16.mxu0 %v474
    %965 = vmatpush1.bf16.msra.mxu0 %v473
    %966 = vmatprep.subr.bf16.mxu0 %v478
    %967 = vmatpush1.bf16.msra.mxu0 %v477
    %968 = vmatprep.subr.bf16.mxu0 %v482
    %969 = vmatpush1.bf16.msra.mxu0 %v481
    %970 = vmatprep.subr.bf16.mxu0 %v486
    %971 = vmatpush1.bf16.msra.mxu0 %v485
    %972 = vmatprep.subr.bf16.mxu0 %v490
    %973 = vmatpush1.bf16.msra.mxu0 %v489
    %974 = vmatprep.subr.bf16.mxu0 %v494
    %975 = vmatpush1.bf16.msra.mxu0 %v493
    %976 = vmatprep.subr.bf16.mxu0 0
    %977 = vmatpush1.bf16.msra.mxu0 0
    %978 = vmatprep.subr.bf16.mxu0 0
    %979 = vmatpush1.bf16.msra.mxu0 0
    %980 = vmatprep.subr.bf16.mxu0 0
    %981 = vmatpush1.bf16.msra.mxu0 0
    %982 = vmatprep.subr.bf16.mxu0 0
    %983 = vmatpush1.bf16.msra.mxu0 0
    %984 = vmatprep.subr.bf16.mxu0 0
    %985 = vmatpush1.bf16.msra.mxu0 0
    %986 = vmatprep.subr.bf16.mxu0 0
    %987 = vmatpush1.bf16.msra.mxu0 0
    %988 = vmatprep.subr.bf16.mxu0 0
    %989 = vmatpush1.bf16.msra.mxu0 0
    %990 = vmatprep.subr.bf16.mxu0 0
    %991 = vmatpush1.bf16.msra.mxu0 0
    %992 = vmatprep.mubr.bf16.mxu0 0
    %993 = vmatmul.mubr.bf16.gmra.mrb[0].mxu0 %v954
    %v994 = vpop.f32.mrb[0].mxu0
    %v995 = vadd.f32 %v956, %v994
    %v996 = vpop.f32.mrb[0].mxu0
    %v997 = vadd.f32 %v957, %v996
    %v998 = vpop.f32.mrb[0].mxu0
    %v999 = vpop.f32.mrb[0].mxu0
    %1000 = vdwg.mxu0
    %1001 = vmatprep.subr.bf16.mxu0 %v468
    %1002 = vmatpush1.bf16.msra.mxu0 %v467
    %1003 = vmatprep.subr.bf16.mxu0 %v472
    %1004 = vmatpush1.bf16.msra.mxu0 %v471
    %1005 = vmatprep.subr.bf16.mxu0 %v476
    %1006 = vmatpush1.bf16.msra.mxu0 %v475
    %1007 = vmatprep.subr.bf16.mxu0 %v480
    %1008 = vmatpush1.bf16.msra.mxu0 %v479
    %1009 = vmatprep.subr.bf16.mxu0 %v484
    %1010 = vmatpush1.bf16.msra.mxu0 %v483
    %1011 = vmatprep.subr.bf16.mxu0 %v488
    %1012 = vmatpush1.bf16.msra.mxu0 %v487
    %1013 = vmatprep.subr.bf16.mxu0 %v492
    %1014 = vmatpush1.bf16.msra.mxu0 %v491
    %1015 = vmatprep.subr.bf16.mxu0 %v496
    %1016 = vmatpush1.bf16.msra.mxu0 %v495
    %1017 = vmatprep.subr.bf16.mxu0 0
    %1018 = vmatpush1.bf16.msra.mxu0 0
    %1019 = vmatprep.subr.bf16.mxu0 0
    %1020 = vmatpush1.bf16.msra.mxu0 0
    %1021 = vmatprep.subr.bf16.mxu0 0
    %1022 = vmatpush1.bf16.msra.mxu0 0
    %1023 = vmatprep.subr.bf16.mxu0 0
    %1024 = vmatpush1.bf16.msra.mxu0 0
    %1025 = vmatprep.subr.bf16.mxu0 0
    %1026 = vmatpush1.bf16.msra.mxu0 0
    %1027 = vmatprep.subr.bf16.mxu0 0
    %1028 = vmatpush1.bf16.msra.mxu0 0
    %1029 = vmatprep.subr.bf16.mxu0 0
    %1030 = vmatpush1.bf16.msra.mxu0 0
    %1031 = vmatprep.subr.bf16.mxu0 0
    %1032 = vmatpush1.bf16.msra.mxu0 0
    %1033 = vmatprep.mubr.bf16.mxu0 0
    %1034 = vmatmul.mubr.bf16.gmra.mrb[0].mxu0 %v954
    %v1035 = vpop.f32.mrb[0].mxu0
    %v1036 = vadd.f32 %v958, %v1035
    %v1037 = vpop.f32.mrb[0].mxu0
    %v1038 = vadd.f32 %v959, %v1037
    %v1039 = vpop.f32.mrb[0].mxu0
    %v1040 = vpop.f32.mrb[0].mxu0
    %1041 = vdwg.mxu0
    %v1042 = vmul.f32 %v995, 0.5
    %v1043 = vtanh.pop %v1042
    %v1044 = vmul.f32 %v1043, 0.5
    %v1045 = vadd.f32 %v1044, 0.5
    %v1046 = vmul.f32 %v997, 0.5
    %v1047 = vtanh.pop %v1046
    %v1048 = vmul.f32 %v1047, 0.5
    %v1049 = vadd.f32 %v1048, 0.5
    %v1050 = vtanh.pop %v1036
    %v1051 = vmul.f32 %v1038, 0.5
    %v1052 = vtanh.pop %v1051
    %v1053 = vmul.f32 %v1052, 0.5
    %v1054 = vadd.f32 %v1053, 0.5
    %v1055 = vmul.f32 %v1045, %v949
    %v1056 = vmul.f32 %v1049, %v1050
    %v1057 = vadd.f32 %v1055, %v1056
    %v1058 = vtanh.pop %v1057
    %v1059 = vmul.f32 %v1054, %v1058
    %s1060 = scalar_lea.vmem [#allocation11], 32
    %1061 = vst [vmem:[%s1060] sm:$0xff] %v1059
    %v1062 = vpack.c.bf16 %v1059, %v1059
    %s1063 = scalar_lea.vmem [#allocation2], 160
    %v1064 = vld [vmem:[%s1063] sm:$0xff]
    %v1065 = vld [vmem:[%s1063 + $0x8] sm:$0xff]
    %v1066 = vld [vmem:[%s1063 + $0x10] sm:$0xff]
    %v1067 = vld [vmem:[%s1063 + $0x18] sm:$0xff]
    %1068 = vmatprep.subr.bf16.mxu0 %v466
    %1069 = vmatpush1.bf16.msra.mxu0 %v465
    %1070 = vmatprep.subr.bf16.mxu0 %v470
    %1071 = vmatpush1.bf16.msra.mxu0 %v469
    %1072 = vmatprep.subr.bf16.mxu0 %v474
    %1073 = vmatpush1.bf16.msra.mxu0 %v473
    %1074 = vmatprep.subr.bf16.mxu0 %v478
    %1075 = vmatpush1.bf16.msra.mxu0 %v477
    %1076 = vmatprep.subr.bf16.mxu0 %v482
    %1077 = vmatpush1.bf16.msra.mxu0 %v481
    %1078 = vmatprep.subr.bf16.mxu0 %v486
    %1079 = vmatpush1.bf16.msra.mxu0 %v485
    %1080 = vmatprep.subr.bf16.mxu0 %v490
    %1081 = vmatpush1.bf16.msra.mxu0 %v489
    %1082 = vmatprep.subr.bf16.mxu0 %v494
    %1083 = vmatpush1.bf16.msra.mxu0 %v493
    %1084 = vmatprep.subr.bf16.mxu0 0
    %1085 = vmatpush1.bf16.msra.mxu0 0
    %1086 = vmatprep.subr.bf16.mxu0 0
    %1087 = vmatpush1.bf16.msra.mxu0 0
    %1088 = vmatprep.subr.bf16.mxu0 0
    %1089 = vmatpush1.bf16.msra.mxu0 0
    %1090 = vmatprep.subr.bf16.mxu0 0
    %1091 = vmatpush1.bf16.msra.mxu0 0
    %1092 = vmatprep.subr.bf16.mxu0 0
    %1093 = vmatpush1.bf16.msra.mxu0 0
    %1094 = vmatprep.subr.bf16.mxu0 0
    %1095 = vmatpush1.bf16.msra.mxu0 0
    %1096 = vmatprep.subr.bf16.mxu0 0
    %1097 = vmatpush1.bf16.msra.mxu0 0
    %1098 = vmatprep.subr.bf16.mxu0 0
    %1099 = vmatpush1.bf16.msra.mxu0 0
    %1100 = vmatprep.mubr.bf16.mxu0 0
    %1101 = vmatmul.mubr.bf16.gmra.mrb[0].mxu0 %v1062
    %v1102 = vpop.f32.mrb[0].mxu0
    %v1103 = vadd.f32 %v1064, %v1102
    %v1104 = vpop.f32.mrb[0].mxu0
    %v1105 = vadd.f32 %v1065, %v1104
    %v1106 = vpop.f32.mrb[0].mxu0
    %v1107 = vpop.f32.mrb[0].mxu0
    %1108 = vdwg.mxu0
    %1109 = vmatprep.subr.bf16.mxu0 %v468
    %1110 = vmatpush1.bf16.msra.mxu0 %v467
    %1111 = vmatprep.subr.bf16.mxu0 %v472
    %1112 = vmatpush1.bf16.msra.mxu0 %v471
    %1113 = vmatprep.subr.bf16.mxu0 %v476
    %1114 = vmatpush1.bf16.msra.mxu0 %v475
    %1115 = vmatprep.subr.bf16.mxu0 %v480
    %1116 = vmatpush1.bf16.msra.mxu0 %v479
    %1117 = vmatprep.subr.bf16.mxu0 %v484
    %1118 = vmatpush1.bf16.msra.mxu0 %v483
    %1119 = vmatprep.subr.bf16.mxu0 %v488
    %1120 = vmatpush1.bf16.msra.mxu0 %v487
    %1121 = vmatprep.subr.bf16.mxu0 %v492
    %1122 = vmatpush1.bf16.msra.mxu0 %v491
    %1123 = vmatprep.subr.bf16.mxu0 %v496
    %1124 = vmatpush1.bf16.msra.mxu0 %v495
    %1125 = vmatprep.subr.bf16.mxu0 0
    %1126 = vmatpush1.bf16.msra.mxu0 0
    %1127 = vmatprep.subr.bf16.mxu0 0
    %1128 = vmatpush1.bf16.msra.mxu0 0
    %1129 = vmatprep.subr.bf16.mxu0 0
    %1130 = vmatpush1.bf16.msra.mxu0 0
    %1131 = vmatprep.subr.bf16.mxu0 0
    %1132 = vmatpush1.bf16.msra.mxu0 0
    %1133 = vmatprep.subr.bf16.mxu0 0
    %1134 = vmatpush1.bf16.msra.mxu0 0
    %1135 = vmatprep.subr.bf16.mxu0 0
    %1136 = vmatpush1.bf16.msra.mxu0 0
    %1137 = vmatprep.subr.bf16.mxu0 0
    %1138 = vmatpush1.bf16.msra.mxu0 0
    %1139 = vmatprep.subr.bf16.mxu0 0
    %1140 = vmatpush1.bf16.msra.mxu0 0
    %1141 = vmatprep.mubr.bf16.mxu0 0
    %1142 = vmatmul.mubr.bf16.gmra.mrb[0].mxu0 %v1062
    %v1143 = vpop.f32.mrb[0].mxu0
    %v1144 = vadd.f32 %v1066, %v1143
    %v1145 = vpop.f32.mrb[0].mxu0
    %v1146 = vadd.f32 %v1067, %v1145
    %v1147 = vpop.f32.mrb[0].mxu0
    %v1148 = vpop.f32.mrb[0].mxu0
    %1149 = vdwg.mxu0
    %v1150 = vmul.f32 %v1103, 0.5
    %v1151 = vtanh.pop %v1150
    %v1152 = vmul.f32 %v1151, 0.5
    %v1153 = vadd.f32 %v1152, 0.5
    %v1154 = vmul.f32 %v1105, 0.5
    %v1155 = vtanh.pop %v1154
    %v1156 = vmul.f32 %v1155, 0.5
    %v1157 = vadd.f32 %v1156, 0.5
    %v1158 = vtanh.pop %v1144
    %v1159 = vmul.f32 %v1146, 0.5
    %v1160 = vtanh.pop %v1159
    %v1161 = vmul.f32 %v1160, 0.5
    %v1162 = vadd.f32 %v1161, 0.5
    %v1163 = vmul.f32 %v1153, %v1057
    %v1164 = vmul.f32 %v1157, %v1158
    %v1165 = vadd.f32 %v1163, %v1164
    %v1166 = vtanh.pop %v1165
    %v1167 = vmul.f32 %v1162, %v1166
    %s1168 = scalar_lea.vmem [#allocation11], 40
    %1169 = vst [vmem:[%s1168] sm:$0xff] %v1167
    %v1170 = vpack.c.bf16 %v1167, %v1167
    %s1171 = scalar_lea.vmem [#allocation2], 192
    %v1172 = vld [vmem:[%s1171] sm:$0xff]
    %v1173 = vld [vmem:[%s1171 + $0x8] sm:$0xff]
    %v1174 = vld [vmem:[%s1171 + $0x10] sm:$0xff]
    %v1175 = vld [vmem:[%s1171 + $0x18] sm:$0xff]
    %1176 = vmatprep.subr.bf16.mxu0 %v466
    %1177 = vmatpush1.bf16.msra.mxu0 %v465
    %1178 = vmatprep.subr.bf16.mxu0 %v470
    %1179 = vmatpush1.bf16.msra.mxu0 %v469
    %1180 = vmatprep.subr.bf16.mxu0 %v474
    %1181 = vmatpush1.bf16.msra.mxu0 %v473
    %1182 = vmatprep.subr.bf16.mxu0 %v478
    %1183 = vmatpush1.bf16.msra.mxu0 %v477
    %1184 = vmatprep.subr.bf16.mxu0 %v482
    %1185 = vmatpush1.bf16.msra.mxu0 %v481
    %1186 = vmatprep.subr.bf16.mxu0 %v486
    %1187 = vmatpush1.bf16.msra.mxu0 %v485
    %1188 = vmatprep.subr.bf16.mxu0 %v490
    %1189 = vmatpush1.bf16.msra.mxu0 %v489
    %1190 = vmatprep.subr.bf16.mxu0 %v494
    %1191 = vmatpush1.bf16.msra.mxu0 %v493
    %1192 = vmatprep.subr.bf16.mxu0 0
    %1193 = vmatpush1.bf16.msra.mxu0 0
    %1194 = vmatprep.subr.bf16.mxu0 0
    %1195 = vmatpush1.bf16.msra.mxu0 0
    %1196 = vmatprep.subr.bf16.mxu0 0
    %1197 = vmatpush1.bf16.msra.mxu0 0
    %1198 = vmatprep.subr.bf16.mxu0 0
    %1199 = vmatpush1.bf16.msra.mxu0 0
    %1200 = vmatprep.subr.bf16.mxu0 0
    %1201 = vmatpush1.bf16.msra.mxu0 0
    %1202 = vmatprep.subr.bf16.mxu0 0
    %1203 = vmatpush1.bf16.msra.mxu0 0
    %1204 = vmatprep.subr.bf16.mxu0 0
    %1205 = vmatpush1.bf16.msra.mxu0 0
    %1206 = vmatprep.subr.bf16.mxu0 0
    %1207 = vmatpush1.bf16.msra.mxu0 0
    %1208 = vmatprep.mubr.bf16.mxu0 0
    %1209 = vmatmul.mubr.bf16.gmra.mrb[0].mxu0 %v1170
    %v1210 = vpop.f32.mrb[0].mxu0
    %v1211 = vadd.f32 %v1172, %v1210
    %v1212 = vpop.f32.mrb[0].mxu0
    %v1213 = vadd.f32 %v1173, %v1212
    %v1214 = vpop.f32.mrb[0].mxu0
    %v1215 = vpop.f32.mrb[0].mxu0
    %1216 = vdwg.mxu0
    %1217 = vmatprep.subr.bf16.mxu0 %v468
    %1218 = vmatpush1.bf16.msra.mxu0 %v467
    %1219 = vmatprep.subr.bf16.mxu0 %v472
    %1220 = vmatpush1.bf16.msra.mxu0 %v471
    %1221 = vmatprep.subr.bf16.mxu0 %v476
    %1222 = vmatpush1.bf16.msra.mxu0 %v475
    %1223 = vmatprep.subr.bf16.mxu0 %v480
    %1224 = vmatpush1.bf16.msra.mxu0 %v479
    %1225 = vmatprep.subr.bf16.mxu0 %v484
    %1226 = vmatpush1.bf16.msra.mxu0 %v483
    %1227 = vmatprep.subr.bf16.mxu0 %v488
    %1228 = vmatpush1.bf16.msra.mxu0 %v487
    %1229 = vmatprep.subr.bf16.mxu0 %v492
    %1230 = vmatpush1.bf16.msra.mxu0 %v491
    %1231 = vmatprep.subr.bf16.mxu0 %v496
    %1232 = vmatpush1.bf16.msra.mxu0 %v495
    %1233 = vmatprep.subr.bf16.mxu0 0
    %1234 = vmatpush1.bf16.msra.mxu0 0
    %1235 = vmatprep.subr.bf16.mxu0 0
    %1236 = vmatpush1.bf16.msra.mxu0 0
    %1237 = vmatprep.subr.bf16.mxu0 0
    %1238 = vmatpush1.bf16.msra.mxu0 0
    %1239 = vmatprep.subr.bf16.mxu0 0
    %1240 = vmatpush1.bf16.msra.mxu0 0
    %1241 = vmatprep.subr.bf16.mxu0 0
    %1242 = vmatpush1.bf16.msra.mxu0 0
    %1243 = vmatprep.subr.bf16.mxu0 0
    %1244 = vmatpush1.bf16.msra.mxu0 0
    %1245 = vmatprep.subr.bf16.mxu0 0
    %1246 = vmatpush1.bf16.msra.mxu0 0
    %1247 = vmatprep.subr.bf16.mxu0 0
    %1248 = vmatpush1.bf16.msra.mxu0 0
    %1249 = vmatprep.mubr.bf16.mxu0 0
    %1250 = vmatmul.mubr.bf16.gmra.mrb[0].mxu0 %v1170
    %v1251 = vpop.f32.mrb[0].mxu0
    %v1252 = vadd.f32 %v1174, %v1251
    %v1253 = vpop.f32.mrb[0].mxu0
    %v1254 = vadd.f32 %v1175, %v1253
    %v1255 = vpop.f32.mrb[0].mxu0
    %v1256 = vpop.f32.mrb[0].mxu0
    %1257 = vdwg.mxu0
    %v1258 = vmul.f32 %v1211, 0.5
    %v1259 = vtanh.pop %v1258
    %v1260 = vmul.f32 %v1259, 0.5
    %v1261 = vadd.f32 %v1260, 0.5
    %v1262 = vmul.f32 %v1213, 0.5
    %v1263 = vtanh.pop %v1262
    %v1264 = vmul.f32 %v1263, 0.5
    %v1265 = vadd.f32 %v1264, 0.5
    %v1266 = vtanh.pop %v1252
    %v1267 = vmul.f32 %v1254, 0.5
    %v1268 = vtanh.pop %v1267
    %v1269 = vmul.f32 %v1268, 0.5
    %v1270 = vadd.f32 %v1269, 0.5
    %v1271 = vmul.f32 %v1261, %v1165
    %v1272 = vmul.f32 %v1265, %v1266
    %v1273 = vadd.f32 %v1271, %v1272
    %v1274 = vtanh.pop %v1273
    %v1275 = vmul.f32 %v1270, %v1274
    %s1276 = scalar_lea.vmem [#allocation11], 48
    %1277 = vst [vmem:[%s1276] sm:$0xff] %v1275
    %v1278 = vpack.c.bf16 %v1275, %v1275
    %s1279 = scalar_lea.vmem [#allocation2], 224
    %v1280 = vld [vmem:[%s1279] sm:$0xff]
    %v1281 = vld [vmem:[%s1279 + $0x8] sm:$0xff]
    %v1282 = vld [vmem:[%s1279 + $0x10] sm:$0xff]
    %v1283 = vld [vmem:[%s1279 + $0x18] sm:$0xff]
    %1284 = vmatprep.subr.bf16.mxu0 %v466
    %1285 = vmatpush1.bf16.msra.mxu0 %v465
    %1286 = vmatprep.subr.bf16.mxu0 %v470
    %1287 = vmatpush1.bf16.msra.mxu0 %v469
    %1288 = vmatprep.subr.bf16.mxu0 %v474
    %1289 = vmatpush1.bf16.msra.mxu0 %v473
    %1290 = vmatprep.subr.bf16.mxu0 %v478
    %1291 = vmatpush1.bf16.msra.mxu0 %v477
    %1292 = vmatprep.subr.bf16.mxu0 %v482
    %1293 = vmatpush1.bf16.msra.mxu0 %v481
    %1294 = vmatprep.subr.bf16.mxu0 %v486
    %1295 = vmatpush1.bf16.msra.mxu0 %v485
    %1296 = vmatprep.subr.bf16.mxu0 %v490
    %1297 = vmatpush1.bf16.msra.mxu0 %v489
    %1298 = vmatprep.subr.bf16.mxu0 %v494
    %1299 = vmatpush1.bf16.msra.mxu0 %v493
    %1300 = vmatprep.subr.bf16.mxu0 0
    %1301 = vmatpush1.bf16.msra.mxu0 0
    %1302 = vmatprep.subr.bf16.mxu0 0
    %1303 = vmatpush1.bf16.msra.mxu0 0
    %1304 = vmatprep.subr.bf16.mxu0 0
    %1305 = vmatpush1.bf16.msra.mxu0 0
    %1306 = vmatprep.subr.bf16.mxu0 0
    %1307 = vmatpush1.bf16.msra.mxu0 0
    %1308 = vmatprep.subr.bf16.mxu0 0
    %1309 = vmatpush1.bf16.msra.mxu0 0
    %1310 = vmatprep.subr.bf16.mxu0 0
    %1311 = vmatpush1.bf16.msra.mxu0 0
    %1312 = vmatprep.subr.bf16.mxu0 0
    %1313 = vmatpush1.bf16.msra.mxu0 0
    %1314 = vmatprep.subr.bf16.mxu0 0
    %1315 = vmatpush1.bf16.msra.mxu0 0
    %1316 = vmatprep.mubr.bf16.mxu0 0
    %1317 = vmatmul.mubr.bf16.gmra.mrb[0].mxu0 %v1278
    %v1318 = vpop.f32.mrb[0].mxu0
    %v1319 = vadd.f32 %v1280, %v1318
    %v1320 = vpop.f32.mrb[0].mxu0
    %v1321 = vadd.f32 %v1281, %v1320
    %v1322 = vpop.f32.mrb[0].mxu0
    %v1323 = vpop.f32.mrb[0].mxu0
    %1324 = vdwg.mxu0
    %1325 = vmatprep.subr.bf16.mxu0 %v468
    %1326 = vmatpush1.bf16.msra.mxu0 %v467
    %1327 = vmatprep.subr.bf16.mxu0 %v472
    %1328 = vmatpush1.bf16.msra.mxu0 %v471
    %1329 = vmatprep.subr.bf16.mxu0 %v476
    %1330 = vmatpush1.bf16.msra.mxu0 %v475
    %1331 = vmatprep.subr.bf16.mxu0 %v480
    %1332 = vmatpush1.bf16.msra.mxu0 %v479
    %1333 = vmatprep.subr.bf16.mxu0 %v484
    %1334 = vmatpush1.bf16.msra.mxu0 %v483
    %1335 = vmatprep.subr.bf16.mxu0 %v488
    %1336 = vmatpush1.bf16.msra.mxu0 %v487
    %1337 = vmatprep.subr.bf16.mxu0 %v492
    %1338 = vmatpush1.bf16.msra.mxu0 %v491
    %1339 = vmatprep.subr.bf16.mxu0 %v496
    %1340 = vmatpush1.bf16.msra.mxu0 %v495
    %1341 = vmatprep.subr.bf16.mxu0 0
    %1342 = vmatpush1.bf16.msra.mxu0 0
    %1343 = vmatprep.subr.bf16.mxu0 0
    %1344 = vmatpush1.bf16.msra.mxu0 0
    %1345 = vmatprep.subr.bf16.mxu0 0
    %1346 = vmatpush1.bf16.msra.mxu0 0
    %1347 = vmatprep.subr.bf16.mxu0 0
    %1348 = vmatpush1.bf16.msra.mxu0 0
    %1349 = vmatprep.subr.bf16.mxu0 0
    %1350 = vmatpush1.bf16.msra.mxu0 0
    %1351 = vmatprep.subr.bf16.mxu0 0
    %1352 = vmatpush1.bf16.msra.mxu0 0
    %1353 = vmatprep.subr.bf16.mxu0 0
    %1354 = vmatpush1.bf16.msra.mxu0 0
    %1355 = vmatprep.subr.bf16.mxu0 0
    %1356 = vmatpush1.bf16.msra.mxu0 0
    %1357 = vmatprep.mubr.bf16.mxu0 0
    %1358 = vmatmul.mubr.bf16.gmra.mrb[0].mxu0 %v1278
    %v1359 = vpop.f32.mrb[0].mxu0
    %v1360 = vadd.f32 %v1282, %v1359
    %v1361 = vpop.f32.mrb[0].mxu0
    %v1362 = vadd.f32 %v1283, %v1361
    %v1363 = vpop.f32.mrb[0].mxu0
    %v1364 = vpop.f32.mrb[0].mxu0
    %1365 = vdwg.mxu0
    %v1366 = vmul.f32 %v1319, 0.5
    %v1367 = vtanh.pop %v1366
    %v1368 = vmul.f32 %v1367, 0.5
    %v1369 = vadd.f32 %v1368, 0.5
    %v1370 = vmul.f32 %v1321, 0.5
    %v1371 = vtanh.pop %v1370
    %v1372 = vmul.f32 %v1371, 0.5
    %v1373 = vadd.f32 %v1372, 0.5
    %v1374 = vtanh.pop %v1360
    %v1375 = vmul.f32 %v1362, 0.5
    %v1376 = vtanh.pop %v1375
    %v1377 = vmul.f32 %v1376, 0.5
    %v1378 = vadd.f32 %v1377, 0.5
    %v1379 = vmul.f32 %v1369, %v1273
    %v1380 = vmul.f32 %v1373, %v1374
    %v1381 = vadd.f32 %v1379, %v1380
    %v1382 = vtanh.pop %v1381
    %v1383 = vmul.f32 %v1378, %v1382
    %s1384 = scalar_lea.vmem [#allocation11], 56
    %1385 = vst [vmem:[%s1384] sm:$0xff] %v1383
    %v1386 = vpack.c.bf16 %v1383, %v1383
    %1387 = vst [vmem:[#allocation3] sm:$0xf] %v1386
    %1388 = vst [vmem:[#allocation4] sm:$0xff] %v1381
    // Predicated region
    $region34: #{tpu_custom_call.1} parent=1 // pred_check
      _
    $region35: #{tpu_custom_call.1} parent=1 // pred_check_branch
      %1390 = sbr.rel (0) target = $region37
    $region36: #{tpu_custom_call.1} parent=1 // pred_region
      %s1392 = ssub.s32 1024, 1024
      %1393 = vsyncadd [#allocation7], %s1392
      %s1394 = sshll.u32 [#allocation11], 4
      %s1395 = int_to_ptr.vmem [resolvable:$true] %s1394
      %1400 = dma.vmem_to_hbm [thread:$0]  %s1395, 1024, %s4, [#allocation7], 128, 128, 8
    $region37: #{tpu_custom_call.1} parent=1 // pred_fallthru
      _
    // Predicated region
    $region38: #{tpu_custom_call.1} parent=1 // pred_check
      _
    $region39: #{tpu_custom_call.1} parent=1 // pred_check_branch
      %1402 = sbr.rel (0) target = $region41
    $region40: #{tpu_custom_call.1} parent=1 // pred_region
      %1403 = dma.done [#allocation7], 1024
    $region41: #{tpu_custom_call.1} parent=1 // pred_fallthru
      _
    %1404 = vsyncpa [#allocation6], 1
    %1405 = vsyncpa [#allocation9], 1
    %1406 = vsyncpa [#allocation7], 1

</llo_original>
